<compile_context>
chip_gen: v5e
topology: v5e:2x2
jax: 0.10.0
libtpu: 0.0.40
codegen_flags: <defaults>
</compile_context>

<pallas_src>
import jax
import jax.numpy as jnp
from jax import lax
from jax.experimental import pallas as pl
from jax.experimental.pallas import tpu as pltpu


# bf16 operands for the conv MXU dots (f32 accumulation).  Set to jnp.float32 for
# bit-level parity with the PyTorch module (check tolerance tightens automatically).
CONV_MXU_DTYPE = jnp.bfloat16

_CONV_BLOCK_B = 32            # images per conv grid step
_MLP_BLOCK_M = 256            # rows per MLP grid step
_VMEM_LIMIT = 32 * 1024 * 1024


def _round_up(n, m):
    return ((n + m - 1) // m) * m


# ----------------------------------------------------------------------------
# Glue: im2col for fused 3x3 conv (pad=1) + 2x2/stride-2 max-pool, NCHW layout.
# Returns (4, k_pad, B*hw):
#   axis 0 : the 4 pooling offsets
#   axis 1 : (kh, kw, c_in)-ordered taps, zero-padded to a multiple of 8
#   axis 2 : columns ordered (image-major, pixel-minor)  -> batch-blockable on the lane axis
# ----------------------------------------------------------------------------
def _im2col_pooled(x_nchw, conv_dtype):
    b, c, h, w = x_nchw.shape
    ho, wo = h // 2, w // 2
    hw = ho * wo
    k = 9 * c
    k_pad = _round_up(k, 8)

    xp = jnp.pad(x_nchw.astype(conv_dtype), ((0, 0), (0, 0), (1, 1), (1, 1)))
    offsets = []
    for pa in range(2):
        for pb in range(2):
            taps = []
            for kh in range(3):
                for kw in range(3):
                    sl = xp[:, :, pa + kh:pa + kh + 2 * ho:2, pb + kw:pb + kw + 2 * wo:2]
                    taps.append(sl.reshape(b, c, hw))
            t = jnp.concatenate(taps, axis=1)                # (B, 9c, hw)
            if k_pad > k:
                t = jnp.pad(t, ((0, 0), (0, k_pad - k), (0, 0)))
            offsets.append(t)
    p = jnp.stack(offsets, axis=0)                           # (4, B, k_pad, hw)
    p = p.transpose(0, 2, 1, 3).reshape(4, k_pad, b * hw)    # columns = (image, pixel)
    return p, k_pad


# ----------------------------------------------------------------------------
# Fused conv + ReLU + maxpool kernel: 4 batched MXU dots per grid step.
# ----------------------------------------------------------------------------
def _conv_pool_kernel(p_ref, w_ref, b_ref, o_ref):
    # p_ref: (4, k_pad, n_cols)   bf16/f32 im2col patches, one slab per pooling offset
    # w_ref: (c_out, k_pad)       transposed (kh,kw,cin) conv weights (VMEM-resident)
    # b_ref: (c_out, 1)           f32 bias
    # o_ref: (c_out, n_cols)      pooled output, lane-dense
    w = w_ref[...]
    m = jnp.dot(w, p_ref[0], preferred_element_type=jnp.float32)
    for o in range(1, 4):                                    # short, unrolled
        m = jnp.maximum(m, jnp.dot(w, p_ref[o], preferred_element_type=jnp.float32))
    # bias + ReLU commute with the monotone max over pooling offsets
    o_ref[...] = jnp.maximum(m + b_ref[...], 0.0)


def conv_relu_pool(x_nchw, w_oihw, bias):
    """x: (B, Cin, H, W) -> (B, Cout, H//2, W//2); 3x3 conv pad=1 + ReLU + 2x2 maxpool."""
    b_sz, c_in, h, w = x_nchw.shape
    c_out = w_oihw.shape[0]
    ho, wo = h // 2, w // 2
    hw = ho * wo
    k = 9 * c_in

    block_b = min(_CONV_BLOCK_B, b_sz)
    b_pad = pl.cdiv(b_sz, block_b) * block_b
    if b_pad != b_sz:
        x_nchw = jnp.pad(x_nchw, ((0, b_pad - b_sz), (0, 0), (0, 0), (0, 0)))

    patches, k_pad = _im2col_pooled(x_nchw, CONV_MXU_DTYPE)           # (4, k_pad, b_pad*hw)

    w_t = jnp.transpose(w_oihw, (0, 2, 3, 1)).reshape(c_out, k)       # (cout, 9*cin)
    if k_pad > k:
        w_t = jnp.pad(w_t, ((0, 0), (0, k_pad - k)))
    w_t = w_t.astype(CONV_MXU_DTYPE)
    b_col = bias.reshape(c_out, 1).astype(jnp.float32)

    n_cols = block_b * hw
    grid = (b_pad // block_b,)

    out_t = pl.pallas_call(
        _conv_pool_kernel,
        out_shape=jax.ShapeDtypeStruct((c_out, b_pad * hw), jnp.float32),
        grid_spec=pltpu.PrefetchScalarGridSpec(
            num_scalar_prefetch=0,
            grid=grid,
            in_specs=[
                pl.BlockSpec((4, k_pad, n_cols), lambda i: (0, 0, i)),
                pl.BlockSpec((c_out, k_pad), lambda i: (0, 0)),       # VMEM-resident
                pl.BlockSpec((c_out, 1), lambda i: (0, 0)),
            ],
            out_specs=pl.BlockSpec((c_out, n_cols), lambda i: (0, i)),
        ),
        compiler_params=pltpu.CompilerParams(
            dimension_semantics=("parallel",),
            vmem_limit_bytes=_VMEM_LIMIT,
        ),
    )(patches, w_t, b_col)

    # (cout, b_pad, ho, wo) -> NCHW; tiny glue transpose, flatten afterwards is free.
    out = out_t.reshape(c_out, b_pad, ho, wo).transpose(1, 0, 2, 3)
    return out[:b_sz] if b_pad != b_sz else out


# ----------------------------------------------------------------------------
# Fused fc1 + ReLU + fc2 kernel (f32), batch-blocked, VMEM-resident weights,
# fc2 output padded to 128 lanes for unmasked stores.
# ----------------------------------------------------------------------------
def _mlp_kernel(x_ref, w1_ref, b1_ref, w2_ref, b2_ref, o_ref):
    h = jnp.dot(x_ref[...], w1_ref[...], preferred_element_type=jnp.float32) + b1_ref[...]
    h = jnp.maximum(h, 0.0)
    o_ref[...] = jnp.dot(h, w2_ref[...], preferred_element_type=jnp.float32) + b2_ref[...]


def mlp_head(x, w1, b1, w2, b2):
    b_sz, d_in = x.shape
    d_hid = w1.shape[1]
    d_out = w2.shape[1]
    d_out_pad = _round_up(max(d_out, 128), 128)

    block_m = min(_MLP_BLOCK_M, b_sz)
    b_pad = pl.cdiv(b_sz, block_m) * block_m
    if b_pad != b_sz:
        x = jnp.pad(x, ((0, b_pad - b_sz), (0, 0)))

    w2p = jnp.pad(w2, ((0, 0), (0, d_out_pad - d_out)))
    b2p = jnp.pad(b2, (0, d_out_pad - d_out)).reshape(1, d_out_pad)
    b1r = b1.reshape(1, d_hid)

    out = pl.pallas_call(
        _mlp_kernel,
        out_shape=jax.ShapeDtypeStruct((b_pad, d_out_pad), jnp.float32),
        grid_spec=pltpu.PrefetchScalarGridSpec(
            num_scalar_prefetch=0,
            grid=(b_pad // block_m,),
            in_specs=[
                pl.BlockSpec((block_m, d_in), lambda i: (i, 0)),
                pl.BlockSpec((d_in, d_hid), lambda i: (0, 0)),        # weights stay resident
                pl.BlockSpec((1, d_hid), lambda i: (0, 0)),
                pl.BlockSpec((d_hid, d_out_pad), lambda i: (0, 0)),
                pl.BlockSpec((1, d_out_pad), lambda i: (0, 0)),
            ],
            out_specs=pl.BlockSpec((block_m, d_out_pad), lambda i: (i, 0)),
        ),
        compiler_params=pltpu.CompilerParams(
            dimension_semantics=("parallel",),
            vmem_limit_bytes=_VMEM_LIMIT,
        ),
    )(x, w1, b1r, w2p, b2p)
    return out[:b_sz, :d_out]


# ----------------------------------------------------------------------------
# Full forward (Pallas) and pure-JAX f32 reference
# ----------------------------------------------------------------------------
@jax.jit
def simple_cnn_forward(x_nchw, w_c1, b_c1, w_c2, b_c2, w_fc1, b_fc1, w_fc2, b_fc2):
    b_sz = x_nchw.shape[0]
    p1 = conv_relu_pool(x_nchw, w_c1, b_c1)            # (B, 16, 16, 16) NCHW
    p2 = conv_relu_pool(p1, w_c2, b_c2)                # (B, 32, 8, 8)   NCHW
    flat = p2.reshape(b_sz, -1)                        # == torch x.view(-1, 32*8*8)
    return mlp_head(flat, w_fc1, b_fc1, w_fc2, b_fc2)  # (B, 10)


def reference_forward(x_nchw, w_c1, b_c1, w_c2, b_c2, w_fc1, b_fc1, w_fc2, b_fc2):
    dn = ("NCHW", "OIHW", "NCHW")
    y = lax.conv_general_dilated(x_nchw, w_c1, (1, 1), "SAME",
                                 dimension_numbers=dn) + b_c1[None, :, None, None]
    y = jnp.maximum(y, 0.0)
    y = lax.reduce_window(y, -jnp.inf, lax.max, (1, 1, 2, 2), (1, 1, 2, 2), "VALID")
    y = lax.conv_general_dilated(y, w_c2, (1, 1), "SAME",
                                 dimension_numbers=dn) + b_c2[None, :, None, None]
    y = jnp.maximum(y, 0.0)
    y = lax.reduce_window(y, -jnp.inf, lax.max, (1, 1, 2, 2), (1, 1, 2, 2), "VALID")
    flat = y.reshape(y.shape[0], -1)
    h = jnp.maximum(flat @ w_fc1 + b_fc1, 0.0)
    return h @ w_fc2 + b_fc2


if __name__ == "__main__":
    key = jax.random.PRNGKey(0)
    kx, k1, k2, k3, k4 = jax.random.split(key, 5)

    B = 2
    # Input must be 32x32 so 32*8*8 matches fc1 (as in the PyTorch module).
    x = jax.random.normal(kx, (B, 3, 32, 32), dtype=jnp.float32)

    # Deterministic synthetic parameters (torch-style OIHW conv weights, He-ish scale).
    w_c1 = jax.random.normal(k1, (16, 3, 3, 3), dtype=jnp.float32) * (2.0 / (3 * 3 * 3)) ** 0.5
    b_c1 = jnp.linspace(-0.1, 0.1, 16, dtype=jnp.float32)
    w_c2 = jax.random.normal(k2, (32, 16, 3, 3), dtype=jnp.float32) * (2.0 / (3 * 3 * 16)) ** 0.5
    b_c2 = jnp.linspace(-0.1, 0.1, 32, dtype=jnp.float32)
    w_fc1 = jax.random.normal(k3, (32 * 8 * 8, 128), dtype=jnp.float32) * (2.0 / 2048.0) ** 0.5
    b_fc1 = jnp.linspace(-0.1, 0.1, 128, dtype=jnp.float32)
    w_fc2 = jax.random.normal(k4, (128, 10), dtype=jnp.float32) * (2.0 / 128.0) ** 0.5
    b_fc2 = jnp.linspace(-0.1, 0.1, 10, dtype=jnp.float32)

    params = (w_c1, b_c1, w_c2, b_c2, w_fc1, b_fc1, w_fc2, b_fc2)

    out = simple_cnn_forward(x, *params)
    out = jax.block_until_ready(out)
    assert out.shape == (B, 10) and out.dtype == jnp.float32

    ref = jax.block_until_ready(reference_forward(x, *params))
    # bf16 conv operands (f32 accumulation) vs the pure-f32 reference: loosen tolerance
    # accordingly, per the review's correctness note (FC head is kept in f32).
    tol = 1e-3 if jnp.dtype(CONV_MXU_DTYPE) == jnp.dtype(jnp.float32) else 6e-2
    max_err = float(jnp.max(jnp.abs(out - ref)))
    assert max_err < tol, f"mismatch vs reference: max abs err = {max_err} (tol {tol})"

    print("KERNEL_OK")
</pallas_src>

<mosaic_0001>
module attributes {stable_mosaic.version = 11 : i64} {
  func.func @_conv_pool_kernel(%arg0: i32, %arg1: memref<4x32x512xbf16, #tpu.memory_space<vmem>>, %arg2: memref<16x32xbf16, #tpu.memory_space<vmem>>, %arg3: memref<16x1xf32, #tpu.memory_space<vmem>>, %arg4: memref<16x512xf32, #tpu.memory_space<vmem>>) attributes {dimension_semantics = [#tpu.dimension_semantics<parallel>], iteration_bounds = array<i64: 1>, scalar_prefetch = 0 : i64, scratch_operands = 0 : i64, tpu.core_type = #tpu.core_type<tc>, window_params = [{transform_indices = @transform_0, window_bounds = array<i64: 4, 32, 512>}, {pipeline_mode = #tpu.pipeline_mode<synchronous>, transform_indices = @transform_1, window_bounds = array<i64: 16, 32>}, {pipeline_mode = #tpu.pipeline_mode<synchronous>, transform_indices = @transform_2, window_bounds = array<i64: 16, 1>}, {transform_indices = @transform_3, window_bounds = array<i64: 16, 512>}]} {
    %c0 = arith.constant 0 : index
    %c0_0 = arith.constant 0 : index
    %0 = vector.load %arg2[%c0, %c0_0] : memref<16x32xbf16, #tpu.memory_space<vmem>>, vector<16x32xbf16>
    %c0_1 = arith.constant 0 : index
    %c0_2 = arith.constant 0 : index
    %c0_3 = arith.constant 0 : index
    %1 = vector.load %arg1[%c0_1, %c0_2, %c0_3] : memref<4x32x512xbf16, #tpu.memory_space<vmem>>, vector<1x32x512xbf16>
    %2 = vector.shape_cast %1 : vector<1x32x512xbf16> to vector<32x512xbf16>
    %cst = arith.constant dense<0.000000e+00> : vector<16x512xf32>
    %3 = tpu.matmul %0, %2, %cst {dimension_numbers = #tpu.dot_dimension_numbers<[1], [0], [0], [1], [0, 0, 1, 1], [], []>} : vector<16x32xbf16>, vector<32x512xbf16>, vector<16x512xf32> -> vector<16x512xf32>
    %c1 = arith.constant 1 : index
    %c0_4 = arith.constant 0 : index
    %c0_5 = arith.constant 0 : index
    %4 = vector.load %arg1[%c1, %c0_4, %c0_5] : memref<4x32x512xbf16, #tpu.memory_space<vmem>>, vector<1x32x512xbf16>
    %5 = vector.shape_cast %4 : vector<1x32x512xbf16> to vector<32x512xbf16>
    %cst_6 = arith.constant dense<0.000000e+00> : vector<16x512xf32>
    %6 = tpu.matmul %0, %5, %cst_6 {dimension_numbers = #tpu.dot_dimension_numbers<[1], [0], [0], [1], [0, 0, 1, 1], [], []>} : vector<16x32xbf16>, vector<32x512xbf16>, vector<16x512xf32> -> vector<16x512xf32>
    %7 = arith.maximumf %3, %6 : vector<16x512xf32>
    %c2 = arith.constant 2 : index
    %c0_7 = arith.constant 0 : index
    %c0_8 = arith.constant 0 : index
    %8 = vector.load %arg1[%c2, %c0_7, %c0_8] : memref<4x32x512xbf16, #tpu.memory_space<vmem>>, vector<1x32x512xbf16>
    %9 = vector.shape_cast %8 : vector<1x32x512xbf16> to vector<32x512xbf16>
    %cst_9 = arith.constant dense<0.000000e+00> : vector<16x512xf32>
    %10 = tpu.matmul %0, %9, %cst_9 {dimension_numbers = #tpu.dot_dimension_numbers<[1], [0], [0], [1], [0, 0, 1, 1], [], []>} : vector<16x32xbf16>, vector<32x512xbf16>, vector<16x512xf32> -> vector<16x512xf32>
    %11 = arith.maximumf %7, %10 : vector<16x512xf32>
    %c3 = arith.constant 3 : index
    %c0_10 = arith.constant 0 : index
    %c0_11 = arith.constant 0 : index
    %12 = vector.load %arg1[%c3, %c0_10, %c0_11] : memref<4x32x512xbf16, #tpu.memory_space<vmem>>, vector<1x32x512xbf16>
    %13 = vector.shape_cast %12 : vector<1x32x512xbf16> to vector<32x512xbf16>
    %cst_12 = arith.constant dense<0.000000e+00> : vector<16x512xf32>
    %14 = tpu.matmul %0, %13, %cst_12 {dimension_numbers = #tpu.dot_dimension_numbers<[1], [0], [0], [1], [0, 0, 1, 1], [], []>} : vector<16x32xbf16>, vector<32x512xbf16>, vector<16x512xf32> -> vector<16x512xf32>
    %15 = arith.maximumf %11, %14 : vector<16x512xf32>
    %c0_13 = arith.constant 0 : index
    %c0_14 = arith.constant 0 : index
    %16 = vector.load %arg3[%c0_13, %c0_14] : memref<16x1xf32, #tpu.memory_space<vmem>>, vector<16x1xf32>
    %17 = vector.broadcast %16 : vector<16x1xf32> to vector<16x512xf32>
    %18 = arith.addf %15, %17 : vector<16x512xf32>
    %cst_15 = arith.constant 0.000000e+00 : f32
    %19 = vector.broadcast %cst_15 : f32 to vector<16x512xf32>
    %20 = arith.maximumf %18, %19 : vector<16x512xf32>
    %c0_16 = arith.constant 0 : index
    %c0_17 = arith.constant 0 : index
    %21 = vector.load %arg4[%c0_16, %c0_17] : memref<16x512xf32, #tpu.memory_space<vmem>>, vector<16x512xf32>
    tpu.vector_store %arg4[%c0_16, %c0_17], %20 {strides = array<i32>} : memref<16x512xf32, #tpu.memory_space<vmem>>, vector<16x512xf32>,
    return
  }
  func.func @transform_0(%arg0: i32) -> (i32, i32, i32) {
    %c0_i32 = arith.constant 0 : i32
    %c0_i32_0 = arith.constant 0 : i32
    %c0_i32_1 = arith.constant 0 : i32
    return %c0_i32, %c0_i32_0, %arg0 : i32, i32, i32
  }
  func.func @transform_1(%arg0: i32) -> (i32, i32) {
    %c0_i32 = arith.constant 0 : i32
    %c0_i32_0 = arith.constant 0 : i32
    %c0_i32_1 = arith.constant 0 : i32
    return %c0_i32, %c0_i32_0 : i32, i32
  }
  func.func @transform_2(%arg0: i32) -> (i32, i32) {
    %c0_i32 = arith.constant 0 : i32
    %c0_i32_0 = arith.constant 0 : i32
    %c0_i32_1 = arith.constant 0 : i32
    return %c0_i32, %c0_i32_0 : i32, i32
  }
  func.func @transform_3(%arg0: i32) -> (i32, i32) {
    %c0_i32 = arith.constant 0 : i32
    %c0_i32_0 = arith.constant 0 : i32
    return %c0_i32, %arg0 : i32, i32
  }
}

module attributes {stable_mosaic.version = 11 : i64} {
  func.func @_conv_pool_kernel(%arg0: i32, %arg1: memref<4x144x128xbf16, #tpu.memory_space<vmem>>, %arg2: memref<32x144xbf16, #tpu.memory_space<vmem>>, %arg3: memref<32x1xf32, #tpu.memory_space<vmem>>, %arg4: memref<32x128xf32, #tpu.memory_space<vmem>>) attributes {dimension_semantics = [#tpu.dimension_semantics<parallel>], iteration_bounds = array<i64: 1>, scalar_prefetch = 0 : i64, scratch_operands = 0 : i64, tpu.core_type = #tpu.core_type<tc>, window_params = [{transform_indices = @transform_0, window_bounds = array<i64: 4, 144, 128>}, {pipeline_mode = #tpu.pipeline_mode<synchronous>, transform_indices = @transform_1, window_bounds = array<i64: 32, 144>}, {pipeline_mode = #tpu.pipeline_mode<synchronous>, transform_indices = @transform_2, window_bounds = array<i64: 32, 1>}, {transform_indices = @transform_3, window_bounds = array<i64: 32, 128>}]} {
    %c0 = arith.constant 0 : index
    %c0_0 = arith.constant 0 : index
    %0 = vector.load %arg2[%c0, %c0_0] : memref<32x144xbf16, #tpu.memory_space<vmem>>, vector<32x144xbf16>
    %c0_1 = arith.constant 0 : index
    %c0_2 = arith.constant 0 : index
    %c0_3 = arith.constant 0 : index
    %1 = vector.load %arg1[%c0_1, %c0_2, %c0_3] : memref<4x144x128xbf16, #tpu.memory_space<vmem>>, vector<1x144x128xbf16>
    %2 = vector.shape_cast %1 : vector<1x144x128xbf16> to vector<144x128xbf16>
    %cst = arith.constant dense<0.000000e+00> : vector<32x128xf32>
    %3 = tpu.matmul %0, %2, %cst {dimension_numbers = #tpu.dot_dimension_numbers<[1], [0], [0], [1], [0, 0, 1, 1], [], []>} : vector<32x144xbf16>, vector<144x128xbf16>, vector<32x128xf32> -> vector<32x128xf32>
    %c1 = arith.constant 1 : index
    %c0_4 = arith.constant 0 : index
    %c0_5 = arith.constant 0 : index
    %4 = vector.load %arg1[%c1, %c0_4, %c0_5] : memref<4x144x128xbf16, #tpu.memory_space<vmem>>, vector<1x144x128xbf16>
    %5 = vector.shape_cast %4 : vector<1x144x128xbf16> to vector<144x128xbf16>
    %cst_6 = arith.constant dense<0.000000e+00> : vector<32x128xf32>
    %6 = tpu.matmul %0, %5, %cst_6 {dimension_numbers = #tpu.dot_dimension_numbers<[1], [0], [0], [1], [0, 0, 1, 1], [], []>} : vector<32x144xbf16>, vector<144x128xbf16>, vector<32x128xf32> -> vector<32x128xf32>
    %7 = arith.maximumf %3, %6 : vector<32x128xf32>
    %c2 = arith.constant 2 : index
    %c0_7 = arith.constant 0 : index
    %c0_8 = arith.constant 0 : index
    %8 = vector.load %arg1[%c2, %c0_7, %c0_8] : memref<4x144x128xbf16, #tpu.memory_space<vmem>>, vector<1x144x128xbf16>
    %9 = vector.shape_cast %8 : vector<1x144x128xbf16> to vector<144x128xbf16>
    %cst_9 = arith.constant dense<0.000000e+00> : vector<32x128xf32>
    %10 = tpu.matmul %0, %9, %cst_9 {dimension_numbers = #tpu.dot_dimension_numbers<[1], [0], [0], [1], [0, 0, 1, 1], [], []>} : vector<32x144xbf16>, vector<144x128xbf16>, vector<32x128xf32> -> vector<32x128xf32>
    %11 = arith.maximumf %7, %10 : vector<32x128xf32>
    %c3 = arith.constant 3 : index
    %c0_10 = arith.constant 0 : index
    %c0_11 = arith.constant 0 : index
    %12 = vector.load %arg1[%c3, %c0_10, %c0_11] : memref<4x144x128xbf16, #tpu.memory_space<vmem>>, vector<1x144x128xbf16>
    %13 = vector.shape_cast %12 : vector<1x144x128xbf16> to vector<144x128xbf16>
    %cst_12 = arith.constant dense<0.000000e+00> : vector<32x128xf32>
    %14 = tpu.matmul %0, %13, %cst_12 {dimension_numbers = #tpu.dot_dimension_numbers<[1], [0], [0], [1], [0, 0, 1, 1], [], []>} : vector<32x144xbf16>, vector<144x128xbf16>, vector<32x128xf32> -> vector<32x128xf32>
    %15 = arith.maximumf %11, %14 : vector<32x128xf32>
    %c0_13 = arith.constant 0 : index
    %c0_14 = arith.constant 0 : index
    %16 = vector.load %arg3[%c0_13, %c0_14] : memref<32x1xf32, #tpu.memory_space<vmem>>, vector<32x1xf32>
    %17 = vector.broadcast %16 : vector<32x1xf32> to vector<32x128xf32>
    %18 = arith.addf %15, %17 : vector<32x128xf32>
    %cst_15 = arith.constant 0.000000e+00 : f32
    %19 = vector.broadcast %cst_15 : f32 to vector<32x128xf32>
    %20 = arith.maximumf %18, %19 : vector<32x128xf32>
    %c0_16 = arith.constant 0 : index
    %c0_17 = arith.constant 0 : index
    %21 = vector.load %arg4[%c0_16, %c0_17] : memref<32x128xf32, #tpu.memory_space<vmem>>, vector<32x128xf32>
    tpu.vector_store %arg4[%c0_16, %c0_17], %20 {strides = array<i32>} : memref<32x128xf32, #tpu.memory_space<vmem>>, vector<32x128xf32>,
    return
  }
  func.func @transform_0(%arg0: i32) -> (i32, i32, i32) {
    %c0_i32 = arith.constant 0 : i32
    %c0_i32_0 = arith.constant 0 : i32
    %c0_i32_1 = arith.constant 0 : i32
    return %c0_i32, %c0_i32_0, %arg0 : i32, i32, i32
  }
  func.func @transform_1(%arg0: i32) -> (i32, i32) {
    %c0_i32 = arith.constant 0 : i32
    %c0_i32_0 = arith.constant 0 : i32
    %c0_i32_1 = arith.constant 0 : i32
    return %c0_i32, %c0_i32_0 : i32, i32
  }
  func.func @transform_2(%arg0: i32) -> (i32, i32) {
    %c0_i32 = arith.constant 0 : i32
    %c0_i32_0 = arith.constant 0 : i32
    %c0_i32_1 = arith.constant 0 : i32
    return %c0_i32, %c0_i32_0 : i32, i32
  }
  func.func @transform_3(%arg0: i32) -> (i32, i32) {
    %c0_i32 = arith.constant 0 : i32
    %c0_i32_0 = arith.constant 0 : i32
    return %c0_i32, %arg0 : i32, i32
  }
}

module attributes {stable_mosaic.version = 11 : i64} {
  func.func @_mlp_kernel(%arg0: i32, %arg1: memref<2x2048xf32, #tpu.memory_space<vmem>>, %arg2: memref<2048x128xf32, #tpu.memory_space<vmem>>, %arg3: memref<1x128xf32, #tpu.memory_space<vmem>>, %arg4: memref<128x128xf32, #tpu.memory_space<vmem>>, %arg5: memref<1x128xf32, #tpu.memory_space<vmem>>, %arg6: memref<2x128xf32, #tpu.memory_space<vmem>>) attributes {dimension_semantics = [#tpu.dimension_semantics<parallel>], iteration_bounds = array<i64: 1>, scalar_prefetch = 0 : i64, scratch_operands = 0 : i64, tpu.core_type = #tpu.core_type<tc>, window_params = [{transform_indices = @transform_0, window_bounds = array<i64: 2, 2048>}, {pipeline_mode = #tpu.pipeline_mode<synchronous>, transform_indices = @transform_1, window_bounds = array<i64: 2048, 128>}, {pipeline_mode = #tpu.pipeline_mode<synchronous>, transform_indices = @transform_2, window_bounds = array<i64: 1, 128>}, {pipeline_mode = #tpu.pipeline_mode<synchronous>, transform_indices = @transform_3, window_bounds = array<i64: 128, 128>}, {pipeline_mode = #tpu.pipeline_mode<synchronous>, transform_indices = @transform_4, window_bounds = array<i64: 1, 128>}, {transform_indices = @transform_5, window_bounds = array<i64: 2, 128>}]} {
    %c0 = arith.constant 0 : index
    %c0_0 = arith.constant 0 : index
    %0 = vector.load %arg1[%c0, %c0_0] : memref<2x2048xf32, #tpu.memory_space<vmem>>, vector<2x2048xf32>
    %c0_1 = arith.constant 0 : index
    %c0_2 = arith.constant 0 : index
    %1 = vector.load %arg2[%c0_1, %c0_2] : memref<2048x128xf32, #tpu.memory_space<vmem>>, vector<2048x128xf32>
    %cst = arith.constant dense<0.000000e+00> : vector<2x128xf32>
    %2 = tpu.matmul %0, %1, %cst {dimension_numbers = #tpu.dot_dimension_numbers<[1], [0], [0], [1], [0, 0, 1, 1], [], []>} : vector<2x2048xf32>, vector<2048x128xf32>, vector<2x128xf32> -> vector<2x128xf32>
    %c0_3 = arith.constant 0 : index
    %c0_4 = arith.constant 0 : index
    %3 = vector.load %arg3[%c0_3, %c0_4] : memref<1x128xf32, #tpu.memory_space<vmem>>, vector<1x128xf32>
    %4 = vector.broadcast %3 : vector<1x128xf32> to vector<2x128xf32>
    %5 = arith.addf %2, %4 : vector<2x128xf32>
    %cst_5 = arith.constant 0.000000e+00 : f32
    %6 = vector.broadcast %cst_5 : f32 to vector<2x128xf32>
    %7 = arith.maximumf %5, %6 : vector<2x128xf32>
    %c0_6 = arith.constant 0 : index
    %c0_7 = arith.constant 0 : index
    %8 = vector.load %arg4[%c0_6, %c0_7] : memref<128x128xf32, #tpu.memory_space<vmem>>, vector<128x128xf32>
    %cst_8 = arith.constant dense<0.000000e+00> : vector<2x128xf32>
    %9 = tpu.matmul %7, %8, %cst_8 {dimension_numbers = #tpu.dot_dimension_numbers<[1], [0], [0], [1], [0, 0, 1, 1], [], []>} : vector<2x128xf32>, vector<128x128xf32>, vector<2x128xf32> -> vector<2x128xf32>
    %c0_9 = arith.constant 0 : index
    %c0_10 = arith.constant 0 : index
    %10 = vector.load %arg5[%c0_9, %c0_10] : memref<1x128xf32, #tpu.memory_space<vmem>>, vector<1x128xf32>
    %11 = vector.broadcast %10 : vector<1x128xf32> to vector<2x128xf32>
    %12 = arith.addf %9, %11 : vector<2x128xf32>
    %c0_11 = arith.constant 0 : index
    %c0_12 = arith.constant 0 : index
    %13 = vector.load %arg6[%c0_11, %c0_12] : memref<2x128xf32, #tpu.memory_space<vmem>>, vector<2x128xf32>
    tpu.vector_store %arg6[%c0_11, %c0_12], %12 {strides = array<i32>} : memref<2x128xf32, #tpu.memory_space<vmem>>, vector<2x128xf32>,
    return
  }
  func.func @transform_0(%arg0: i32) -> (i32, i32) {
    %c0_i32 = arith.constant 0 : i32
    %c0_i32_0 = arith.constant 0 : i32
    return %arg0, %c0_i32 : i32, i32
  }
  func.func @transform_1(%arg0: i32) -> (i32, i32) {
    %c0_i32 = arith.constant 0 : i32
    %c0_i32_0 = arith.constant 0 : i32
    %c0_i32_1 = arith.constant 0 : i32
    return %c0_i32, %c0_i32_0 : i32, i32
  }
  func.func @transform_2(%arg0: i32) -> (i32, i32) {
    %c0_i32 = arith.constant 0 : i32
    %c0_i32_0 = arith.constant 0 : i32
    %c0_i32_1 = arith.constant 0 : i32
    return %c0_i32, %c0_i32_0 : i32, i32
  }
  func.func @transform_3(%arg0: i32) -> (i32, i32) {
    %c0_i32 = arith.constant 0 : i32
    %c0_i32_0 = arith.constant 0 : i32
    %c0_i32_1 = arith.constant 0 : i32
    return %c0_i32, %c0_i32_0 : i32, i32
  }
  func.func @transform_4(%arg0: i32) -> (i32, i32) {
    %c0_i32 = arith.constant 0 : i32
    %c0_i32_0 = arith.constant 0 : i32
    %c0_i32_1 = arith.constant 0 : i32
    return %c0_i32, %c0_i32_0 : i32, i32
  }
  func.func @transform_5(%arg0: i32) -> (i32, i32) {
    %c0_i32 = arith.constant 0 : i32
    %c0_i32_0 = arith.constant 0 : i32
    return %arg0, %c0_i32 : i32, i32
  }
}

</mosaic_0001>

<llo_original>
// kernel: simple_cnn_forward.3
$region0: #{simple_cnn_forward.3}
  #allocation0 [shape = 'u32[]', space=smem, size = 0x4, offset = 0x4, fixed_abs, tag = 'smem constant byte address 0x4 - core index']
  #allocation1 [shape = 'u32[72,128]{1,0:T(1,128)}', space=vmem, size = 0x9000, scoped, tag = 'internal scratch']
  %s0 = inlined_call_operand.vmem [shape: bf16[4,32,512], index: 0, kind: input, shape index: {}]
  %s1 = inlined_call_operand.vmem [shape: bf16[16,32], index: 1, kind: input, shape index: {}]
  %s2 = inlined_call_operand.vmem [shape: f32[16,1], index: 2, kind: input, shape index: {}]
  %s3 = inlined_call_operand.vmem [shape: f32[16,512], index: 3, kind: output, shape index: {}]
  %s4 = sld [smem:[#allocation0]]
  $region22: #{simple_cnn_forward.3} parent=0
    _
  %s6 = ssub.s32 1, %s4
  %s7 = scalar_select 0, %s6, %s4
  // Predicated region
  $region2: #{simple_cnn_forward.3} parent=0 // pred_check
    _
  $region3: #{simple_cnn_forward.3} parent=0 // pred_check_branch
    %9 = sbr.rel (0) target = $region5
  $region4: #{simple_cnn_forward.3} parent=0 // pred_region
    _
  $region5: #{simple_cnn_forward.3} parent=0 // pred_fallthru
    _
  // Predicated region
  $region6: #{simple_cnn_forward.3} parent=0 // pred_check
    _
  $region7: #{simple_cnn_forward.3} parent=0 // pred_check_branch
    %11 = sbr.rel (0) target = $region9
  $region8: #{simple_cnn_forward.3} parent=0 // pred_region
    _
  $region9: #{simple_cnn_forward.3} parent=0 // pred_fallthru
    _
  // Predicated region
  $region10: #{simple_cnn_forward.3} parent=0 // pred_check
    _
  $region11: #{simple_cnn_forward.3} parent=0 // pred_check_branch
    %13 = sbr.rel (0) target = $region13
  $region12: #{simple_cnn_forward.3} parent=0 // pred_region
    _
  $region13: #{simple_cnn_forward.3} parent=0 // pred_fallthru
    _
  %v15 = vld [vmem:[%s1] sm:$0xf]
  %v16 = vld [vmem:[%s1 + $0x4] sm:$0xf]
  %v17 = vld [vmem:[%s0] sm:$0xff]
  %v18 = vld [vmem:[%s0 + $0x8] sm:$0xff]
  %v19 = vld [vmem:[%s0 + $0x10] sm:$0xff]
  %v20 = vld [vmem:[%s0 + $0x18] sm:$0xff]
  %v21 = vld [vmem:[%s0 + $0x20] sm:$0xff]
  %v22 = vld [vmem:[%s0 + $0x28] sm:$0xff]
  %v23 = vld [vmem:[%s0 + $0x30] sm:$0xff]
  %v24 = vld [vmem:[%s0 + $0x38] sm:$0xff]
  %v27 = vunpack.c.l.b16 %v15
  %v28 = vunpack.c.l.b16 %v16
  %v29 = vpack.c.b16 %v28, %v27
  %v38 = vunpack.c.l.b16 %v17
  %v39 = vunpack.c.h.b16 %v17
  %v40 = vunpack.c.l.b16 %v18
  %v41 = vunpack.c.h.b16 %v18
  %v42 = vunpack.c.l.b16 %v19
  %v43 = vunpack.c.h.b16 %v19
  %v44 = vunpack.c.l.b16 %v20
  %v45 = vunpack.c.h.b16 %v20
  %v46 = vunpack.c.l.b16 %v21
  %v47 = vunpack.c.h.b16 %v21
  %v48 = vunpack.c.l.b16 %v22
  %v49 = vunpack.c.h.b16 %v22
  %v50 = vunpack.c.l.b16 %v23
  %v51 = vunpack.c.h.b16 %v23
  %v52 = vunpack.c.l.b16 %v24
  %v53 = vunpack.c.h.b16 %v24
  %v54 = vpack.c.b16 %v42, %v38
  %v55 = vpack.c.b16 %v43, %v39
  %v56 = vpack.c.b16 %v44, %v40
  %v57 = vpack.c.b16 %v45, %v41
  %v58 = vpack.c.b16 %v50, %v46
  %v59 = vpack.c.b16 %v51, %v47
  %v60 = vpack.c.b16 %v52, %v48
  %v61 = vpack.c.b16 %v53, %v49
  %vm70 = vcmask 261120
  %v72 = vsel %vm70, %v29, 0
  %74 = vmatpush.bf16.msra.mxu0 0
  %75 = vmatpush.bf16.msra.mxu0 0
  %76 = vmatpush.bf16.msra.mxu0 0
  %77 = vmatpush.bf16.msra.mxu0 0
  %78 = vmatpush.bf16.msra.mxu0 0
  %79 = vmatpush.bf16.msra.mxu0 0
  %80 = vmatpush.bf16.msra.mxu0 %v58
  %81 = vmatpush.bf16.msra.mxu0 %v54
  %82 = vmatmul.bf16.gmra.mxu0 %v72
  %v83 = vpop.f32.mrf.mxu0
  %v84 = vadd.f32 0.0, %v83
  %v85 = vpop.f32.mrf.mxu0
  %v86 = vadd.f32 0.0, %v85
  %87 = vdwg.mxu0
  %88 = vmatpush.bf16.msra.mxu0 0
  %89 = vmatpush.bf16.msra.mxu0 0
  %90 = vmatpush.bf16.msra.mxu0 0
  %91 = vmatpush.bf16.msra.mxu0 0
  %92 = vmatpush.bf16.msra.mxu0 0
  %93 = vmatpush.bf16.msra.mxu0 0
  %94 = vmatpush.bf16.msra.mxu0 %v59
  %95 = vmatpush.bf16.msra.mxu0 %v55
  %96 = vmatmul.bf16.gmra.mxu0 %v72
  %v97 = vpop.f32.mrf.mxu0
  %v98 = vadd.f32 0.0, %v97
  %v99 = vpop.f32.mrf.mxu0
  %v100 = vadd.f32 0.0, %v99
  %101 = vdwg.mxu0
  %102 = vmatpush.bf16.msra.mxu0 0
  %103 = vmatpush.bf16.msra.mxu0 0
  %104 = vmatpush.bf16.msra.mxu0 0
  %105 = vmatpush.bf16.msra.mxu0 0
  %106 = vmatpush.bf16.msra.mxu0 0
  %107 = vmatpush.bf16.msra.mxu0 0
  %108 = vmatpush.bf16.msra.mxu0 %v60
  %109 = vmatpush.bf16.msra.mxu0 %v56
  %110 = vmatmul.bf16.gmra.mxu0 %v72
  %v111 = vpop.f32.mrf.mxu0
  %v112 = vadd.f32 0.0, %v111
  %v113 = vpop.f32.mrf.mxu0
  %v114 = vadd.f32 0.0, %v113
  %115 = vdwg.mxu0
  %116 = vmatpush.bf16.msra.mxu0 0
  %117 = vmatpush.bf16.msra.mxu0 0
  %118 = vmatpush.bf16.msra.mxu0 0
  %119 = vmatpush.bf16.msra.mxu0 0
  %120 = vmatpush.bf16.msra.mxu0 0
  %121 = vmatpush.bf16.msra.mxu0 0
  %122 = vmatpush.bf16.msra.mxu0 %v61
  %123 = vmatpush.bf16.msra.mxu0 %v57
  %124 = vmatmul.bf16.gmra.mxu0 %v72
  %v125 = vpop.f32.mrf.mxu0
  %v126 = vadd.f32 0.0, %v125
  %v127 = vpop.f32.mrf.mxu0
  %v128 = vadd.f32 0.0, %v127
  %129 = vdwg.mxu0
  %s130 = scalar_lea.vmem %s0, 64
  %v131 = vld [vmem:[%s130] sm:$0xff]
  %v132 = vld [vmem:[%s130 + $0x8] sm:$0xff]
  %v133 = vld [vmem:[%s130 + $0x10] sm:$0xff]
  %v134 = vld [vmem:[%s130 + $0x18] sm:$0xff]
  %v135 = vld [vmem:[%s130 + $0x20] sm:$0xff]
  %v136 = vld [vmem:[%s130 + $0x28] sm:$0xff]
  %v137 = vld [vmem:[%s130 + $0x30] sm:$0xff]
  %v138 = vld [vmem:[%s130 + $0x38] sm:$0xff]
  %v147 = vunpack.c.l.b16 %v131
  %v148 = vunpack.c.h.b16 %v131
  %v149 = vunpack.c.l.b16 %v132
  %v150 = vunpack.c.h.b16 %v132
  %v151 = vunpack.c.l.b16 %v133
  %v152 = vunpack.c.h.b16 %v133
  %v153 = vunpack.c.l.b16 %v134
  %v154 = vunpack.c.h.b16 %v134
  %v155 = vunpack.c.l.b16 %v135
  %v156 = vunpack.c.h.b16 %v135
  %v157 = vunpack.c.l.b16 %v136
  %v158 = vunpack.c.h.b16 %v136
  %v159 = vunpack.c.l.b16 %v137
  %v160 = vunpack.c.h.b16 %v137
  %v161 = vunpack.c.l.b16 %v138
  %v162 = vunpack.c.h.b16 %v138
  %v163 = vpack.c.b16 %v151, %v147
  %v164 = vpack.c.b16 %v152, %v148
  %v165 = vpack.c.b16 %v153, %v149
  %v166 = vpack.c.b16 %v154, %v150
  %v167 = vpack.c.b16 %v159, %v155
  %v168 = vpack.c.b16 %v160, %v156
  %v169 = vpack.c.b16 %v161, %v157
  %v170 = vpack.c.b16 %v162, %v158
  %179 = vmatpush.bf16.msra.mxu0 0
  %180 = vmatpush.bf16.msra.mxu0 0
  %181 = vmatpush.bf16.msra.mxu0 0
  %182 = vmatpush.bf16.msra.mxu0 0
  %183 = vmatpush.bf16.msra.mxu0 0
  %184 = vmatpush.bf16.msra.mxu0 0
  %185 = vmatpush.bf16.msra.mxu0 %v167
  %186 = vmatpush.bf16.msra.mxu0 %v163
  %187 = vmatmul.bf16.gmra.mxu0 %v72
  %v188 = vpop.f32.mrf.mxu0
  %v189 = vadd.f32 0.0, %v188
  %v190 = vpop.f32.mrf.mxu0
  %v191 = vadd.f32 0.0, %v190
  %192 = vdwg.mxu0
  %193 = vmatpush.bf16.msra.mxu0 0
  %194 = vmatpush.bf16.msra.mxu0 0
  %195 = vmatpush.bf16.msra.mxu0 0
  %196 = vmatpush.bf16.msra.mxu0 0
  %197 = vmatpush.bf16.msra.mxu0 0
  %198 = vmatpush.bf16.msra.mxu0 0
  %199 = vmatpush.bf16.msra.mxu0 %v168
  %200 = vmatpush.bf16.msra.mxu0 %v164
  %201 = vmatmul.bf16.gmra.mxu0 %v72
  %v202 = vpop.f32.mrf.mxu0
  %v203 = vadd.f32 0.0, %v202
  %v204 = vpop.f32.mrf.mxu0
  %v205 = vadd.f32 0.0, %v204
  %206 = vdwg.mxu0
  %207 = vmatpush.bf16.msra.mxu0 0
  %208 = vmatpush.bf16.msra.mxu0 0
  %209 = vmatpush.bf16.msra.mxu0 0
  %210 = vmatpush.bf16.msra.mxu0 0
  %211 = vmatpush.bf16.msra.mxu0 0
  %212 = vmatpush.bf16.msra.mxu0 0
  %213 = vmatpush.bf16.msra.mxu0 %v169
  %214 = vmatpush.bf16.msra.mxu0 %v165
  %215 = vmatmul.bf16.gmra.mxu0 %v72
  %v216 = vpop.f32.mrf.mxu0
  %v217 = vadd.f32 0.0, %v216
  %v218 = vpop.f32.mrf.mxu0
  %v219 = vadd.f32 0.0, %v218
  %220 = vdwg.mxu0
  %221 = vmatpush.bf16.msra.mxu0 0
  %222 = vmatpush.bf16.msra.mxu0 0
  %223 = vmatpush.bf16.msra.mxu0 0
  %224 = vmatpush.bf16.msra.mxu0 0
  %225 = vmatpush.bf16.msra.mxu0 0
  %226 = vmatpush.bf16.msra.mxu0 0
  %227 = vmatpush.bf16.msra.mxu0 %v170
  %228 = vmatpush.bf16.msra.mxu0 %v166
  %229 = vmatmul.bf16.gmra.mxu0 %v72
  %v230 = vpop.f32.mrf.mxu0
  %v231 = vadd.f32 0.0, %v230
  %v232 = vpop.f32.mrf.mxu0
  %v233 = vadd.f32 0.0, %v232
  %234 = vdwg.mxu0
  %v235 = vmax.f32 %v84, %v189
  %v236 = vmax.f32 %v98, %v203
  %v237 = vmax.f32 %v112, %v217
  %v238 = vmax.f32 %v126, %v231
  %v239 = vmax.f32 %v86, %v191
  %v240 = vmax.f32 %v100, %v205
  %v241 = vmax.f32 %v114, %v219
  %v242 = vmax.f32 %v128, %v233
  %s243 = scalar_lea.vmem %s0, 128
  %v244 = vld [vmem:[%s243] sm:$0xff]
  %v245 = vld [vmem:[%s243 + $0x8] sm:$0xff]
  %v246 = vld [vmem:[%s243 + $0x10] sm:$0xff]
  %v247 = vld [vmem:[%s243 + $0x18] sm:$0xff]
  %v248 = vld [vmem:[%s243 + $0x20] sm:$0xff]
  %v249 = vld [vmem:[%s243 + $0x28] sm:$0xff]
  %v250 = vld [vmem:[%s243 + $0x30] sm:$0xff]
  %v251 = vld [vmem:[%s243 + $0x38] sm:$0xff]
  %v260 = vunpack.c.l.b16 %v244
  %v261 = vunpack.c.h.b16 %v244
  %v262 = vunpack.c.l.b16 %v245
  %v263 = vunpack.c.h.b16 %v245
  %v264 = vunpack.c.l.b16 %v246
  %v265 = vunpack.c.h.b16 %v246
  %v266 = vunpack.c.l.b16 %v247
  %v267 = vunpack.c.h.b16 %v247
  %v268 = vunpack.c.l.b16 %v248
  %v269 = vunpack.c.h.b16 %v248
  %v270 = vunpack.c.l.b16 %v249
  %v271 = vunpack.c.h.b16 %v249
  %v272 = vunpack.c.l.b16 %v250
  %v273 = vunpack.c.h.b16 %v250
  %v274 = vunpack.c.l.b16 %v251
  %v275 = vunpack.c.h.b16 %v251
  %v276 = vpack.c.b16 %v264, %v260
  %v277 = vpack.c.b16 %v265, %v261
  %v278 = vpack.c.b16 %v266, %v262
  %v279 = vpack.c.b16 %v267, %v263
  %v280 = vpack.c.b16 %v272, %v268
  %v281 = vpack.c.b16 %v273, %v269
  %v282 = vpack.c.b16 %v274, %v270
  %v283 = vpack.c.b16 %v275, %v271
  %292 = vmatpush.bf16.msra.mxu0 0
  %293 = vmatpush.bf16.msra.mxu0 0
  %294 = vmatpush.bf16.msra.mxu0 0
  %295 = vmatpush.bf16.msra.mxu0 0
  %296 = vmatpush.bf16.msra.mxu0 0
  %297 = vmatpush.bf16.msra.mxu0 0
  %298 = vmatpush.bf16.msra.mxu0 %v280
  %299 = vmatpush.bf16.msra.mxu0 %v276
  %300 = vmatmul.bf16.gmra.mxu0 %v72
  %v301 = vpop.f32.mrf.mxu0
  %v302 = vadd.f32 0.0, %v301
  %v303 = vpop.f32.mrf.mxu0
  %v304 = vadd.f32 0.0, %v303
  %305 = vdwg.mxu0
  %306 = vmatpush.bf16.msra.mxu0 0
  %307 = vmatpush.bf16.msra.mxu0 0
  %308 = vmatpush.bf16.msra.mxu0 0
  %309 = vmatpush.bf16.msra.mxu0 0
  %310 = vmatpush.bf16.msra.mxu0 0
  %311 = vmatpush.bf16.msra.mxu0 0
  %312 = vmatpush.bf16.msra.mxu0 %v281
  %313 = vmatpush.bf16.msra.mxu0 %v277
  %314 = vmatmul.bf16.gmra.mxu0 %v72
  %v315 = vpop.f32.mrf.mxu0
  %v316 = vadd.f32 0.0, %v315
  %v317 = vpop.f32.mrf.mxu0
  %v318 = vadd.f32 0.0, %v317
  %319 = vdwg.mxu0
  %320 = vmatpush.bf16.msra.mxu0 0
  %321 = vmatpush.bf16.msra.mxu0 0
  %322 = vmatpush.bf16.msra.mxu0 0
  %323 = vmatpush.bf16.msra.mxu0 0
  %324 = vmatpush.bf16.msra.mxu0 0
  %325 = vmatpush.bf16.msra.mxu0 0
  %326 = vmatpush.bf16.msra.mxu0 %v282
  %327 = vmatpush.bf16.msra.mxu0 %v278
  %328 = vmatmul.bf16.gmra.mxu0 %v72
  %v329 = vpop.f32.mrf.mxu0
  %v330 = vadd.f32 0.0, %v329
  %v331 = vpop.f32.mrf.mxu0
  %v332 = vadd.f32 0.0, %v331
  %333 = vdwg.mxu0
  %334 = vmatpush.bf16.msra.mxu0 0
  %335 = vmatpush.bf16.msra.mxu0 0
  %336 = vmatpush.bf16.msra.mxu0 0
  %337 = vmatpush.bf16.msra.mxu0 0
  %338 = vmatpush.bf16.msra.mxu0 0
  %339 = vmatpush.bf16.msra.mxu0 0
  %340 = vmatpush.bf16.msra.mxu0 %v283
  %341 = vmatpush.bf16.msra.mxu0 %v279
  %342 = vmatmul.bf16.gmra.mxu0 %v72
  %v343 = vpop.f32.mrf.mxu0
  %v344 = vadd.f32 0.0, %v343
  %v345 = vpop.f32.mrf.mxu0
  %v346 = vadd.f32 0.0, %v345
  %347 = vdwg.mxu0
  %v348 = vmax.f32 %v235, %v302
  %v349 = vmax.f32 %v236, %v316
  %v350 = vmax.f32 %v237, %v330
  %v351 = vmax.f32 %v238, %v344
  %v352 = vmax.f32 %v239, %v304
  %v353 = vmax.f32 %v240, %v318
  %v354 = vmax.f32 %v241, %v332
  %v355 = vmax.f32 %v242, %v346
  %s356 = scalar_lea.vmem %s0, 192
  %v357 = vld [vmem:[%s356] sm:$0xff]
  %v358 = vld [vmem:[%s356 + $0x8] sm:$0xff]
  %v359 = vld [vmem:[%s356 + $0x10] sm:$0xff]
  %v360 = vld [vmem:[%s356 + $0x18] sm:$0xff]
  %v361 = vld [vmem:[%s356 + $0x20] sm:$0xff]
  %v362 = vld [vmem:[%s356 + $0x28] sm:$0xff]
  %v363 = vld [vmem:[%s356 + $0x30] sm:$0xff]
  %v364 = vld [vmem:[%s356 + $0x38] sm:$0xff]
  %v373 = vunpack.c.l.b16 %v357
  %v374 = vunpack.c.h.b16 %v357
  %v375 = vunpack.c.l.b16 %v358
  %v376 = vunpack.c.h.b16 %v358
  %v377 = vunpack.c.l.b16 %v359
  %v378 = vunpack.c.h.b16 %v359
  %v379 = vunpack.c.l.b16 %v360
  %v380 = vunpack.c.h.b16 %v360
  %v381 = vunpack.c.l.b16 %v361
  %v382 = vunpack.c.h.b16 %v361
  %v383 = vunpack.c.l.b16 %v362
  %v384 = vunpack.c.h.b16 %v362
  %v385 = vunpack.c.l.b16 %v363
  %v386 = vunpack.c.h.b16 %v363
  %v387 = vunpack.c.l.b16 %v364
  %v388 = vunpack.c.h.b16 %v364
  %v389 = vpack.c.b16 %v377, %v373
  %v390 = vpack.c.b16 %v378, %v374
  %v391 = vpack.c.b16 %v379, %v375
  %v392 = vpack.c.b16 %v380, %v376
  %v393 = vpack.c.b16 %v385, %v381
  %v394 = vpack.c.b16 %v386, %v382
  %v395 = vpack.c.b16 %v387, %v383
  %v396 = vpack.c.b16 %v388, %v384
  %405 = vmatpush.bf16.msra.mxu0 0
  %406 = vmatpush.bf16.msra.mxu0 0
  %407 = vmatpush.bf16.msra.mxu0 0
  %408 = vmatpush.bf16.msra.mxu0 0
  %409 = vmatpush.bf16.msra.mxu0 0
  %410 = vmatpush.bf16.msra.mxu0 0
  %411 = vmatpush.bf16.msra.mxu0 %v393
  %412 = vmatpush.bf16.msra.mxu0 %v389
  %413 = vmatmul.bf16.gmra.mxu0 %v72
  %v414 = vpop.f32.mrf.mxu0
  %v415 = vadd.f32 0.0, %v414
  %v416 = vpop.f32.mrf.mxu0
  %v417 = vadd.f32 0.0, %v416
  %418 = vdwg.mxu0
  %419 = vmatpush.bf16.msra.mxu0 0
  %420 = vmatpush.bf16.msra.mxu0 0
  %421 = vmatpush.bf16.msra.mxu0 0
  %422 = vmatpush.bf16.msra.mxu0 0
  %423 = vmatpush.bf16.msra.mxu0 0
  %424 = vmatpush.bf16.msra.mxu0 0
  %425 = vmatpush.bf16.msra.mxu0 %v394
  %426 = vmatpush.bf16.msra.mxu0 %v390
  %427 = vmatmul.bf16.gmra.mxu0 %v72
  %v428 = vpop.f32.mrf.mxu0
  %v429 = vadd.f32 0.0, %v428
  %v430 = vpop.f32.mrf.mxu0
  %v431 = vadd.f32 0.0, %v430
  %432 = vdwg.mxu0
  %433 = vmatpush.bf16.msra.mxu0 0
  %434 = vmatpush.bf16.msra.mxu0 0
  %435 = vmatpush.bf16.msra.mxu0 0
  %436 = vmatpush.bf16.msra.mxu0 0
  %437 = vmatpush.bf16.msra.mxu0 0
  %438 = vmatpush.bf16.msra.mxu0 0
  %439 = vmatpush.bf16.msra.mxu0 %v395
  %440 = vmatpush.bf16.msra.mxu0 %v391
  %441 = vmatmul.bf16.gmra.mxu0 %v72
  %v442 = vpop.f32.mrf.mxu0
  %v443 = vadd.f32 0.0, %v442
  %v444 = vpop.f32.mrf.mxu0
  %v445 = vadd.f32 0.0, %v444
  %446 = vdwg.mxu0
  %447 = vmatpush.bf16.msra.mxu0 0
  %448 = vmatpush.bf16.msra.mxu0 0
  %449 = vmatpush.bf16.msra.mxu0 0
  %450 = vmatpush.bf16.msra.mxu0 0
  %451 = vmatpush.bf16.msra.mxu0 0
  %452 = vmatpush.bf16.msra.mxu0 0
  %453 = vmatpush.bf16.msra.mxu0 %v396
  %454 = vmatpush.bf16.msra.mxu0 %v392
  %455 = vmatmul.bf16.gmra.mxu0 %v72
  %v456 = vpop.f32.mrf.mxu0
  %v457 = vadd.f32 0.0, %v456
  %v458 = vpop.f32.mrf.mxu0
  %v459 = vadd.f32 0.0, %v458
  %460 = vdwg.mxu0
  %v461 = vmax.f32 %v348, %v415
  %v462 = vmax.f32 %v349, %v429
  %v463 = vmax.f32 %v350, %v443
  %v464 = vmax.f32 %v351, %v457
  %v465 = vmax.f32 %v352, %v417
  %v466 = vmax.f32 %v353, %v431
  %v467 = vmax.f32 %v354, %v445
  %v468 = vmax.f32 %v355, %v459
  %v469 = vld [vmem:[%s2] sm:$0xff]
  %v470 = vld [vmem:[%s2 + $0x8] sm:$0xff]
  %472 = vset.pattern.permute.xlu0 0
  %473 = vperm.xlu0 %472, %v469
  %v474 = vpop.permute.xlu0 %473
  %477 = vset.pattern.permute.xlu0 0
  %478 = vperm.xlu0 %477, %v470
  %v479 = vpop.permute.xlu0 %478
  %v481 = vadd.f32 %v461, %v474
  %v482 = vadd.f32 %v462, %v474
  %v483 = vadd.f32 %v463, %v474
  %v484 = vadd.f32 %v464, %v474
  %v485 = vadd.f32 %v465, %v479
  %v486 = vadd.f32 %v466, %v479
  %v487 = vadd.f32 %v467, %v479
  %v488 = vadd.f32 %v468, %v479
  %v489 = vmax.f32 %v481, 0.0
  %v490 = vmax.f32 %v482, 0.0
  %v491 = vmax.f32 %v483, 0.0
  %v492 = vmax.f32 %v484, 0.0
  %v493 = vmax.f32 %v485, 0.0
  %v494 = vmax.f32 %v486, 0.0
  %v495 = vmax.f32 %v487, 0.0
  %v496 = vmax.f32 %v488, 0.0
  %497 = vst [vmem:[%s3] sm:$0xff] %v489
  %498 = vst [vmem:[%s3 + $0x8] sm:$0xff] %v490
  %499 = vst [vmem:[%s3 + $0x10] sm:$0xff] %v491
  %500 = vst [vmem:[%s3 + $0x18] sm:$0xff] %v492
  %501 = vst [vmem:[%s3 + $0x20] sm:$0xff] %v493
  %502 = vst [vmem:[%s3 + $0x28] sm:$0xff] %v494
  %503 = vst [vmem:[%s3 + $0x30] sm:$0xff] %v495
  %504 = vst [vmem:[%s3 + $0x38] sm:$0xff] %v496
  // Predicated region
  $region14: #{simple_cnn_forward.3} parent=0 // pred_check
    _
  $region15: #{simple_cnn_forward.3} parent=0 // pred_check_branch
    %506 = sbr.rel (0) target = $region17
  $region16: #{simple_cnn_forward.3} parent=0 // pred_region
    _
  $region17: #{simple_cnn_forward.3} parent=0 // pred_fallthru
    _
  // Predicated region
  $region18: #{simple_cnn_forward.3} parent=0 // pred_check
    _
  $region19: #{simple_cnn_forward.3} parent=0 // pred_check_branch
    %508 = sbr.rel (0) target = $region21
  $region20: #{simple_cnn_forward.3} parent=0 // pred_region
    _
  $region21: #{simple_cnn_forward.3} parent=0 // pred_fallthru
    _

// kernel: simple_cnn_forward.4
$region0: #{simple_cnn_forward.4}
  #allocation0 [shape = 'u32[]', space=smem, size = 0x4, offset = 0x4, fixed_abs, tag = 'smem constant byte address 0x4 - core index']
  #allocation1 [shape = 'u32[72,128]{1,0:T(1,128)}', space=vmem, size = 0x9000, scoped, tag = 'internal scratch']
  %s0 = inlined_call_operand.vmem [shape: bf16[4,144,128], index: 0, kind: input, shape index: {}]
  %s1 = inlined_call_operand.vmem [shape: bf16[32,144], index: 1, kind: input, shape index: {}]
  %s2 = inlined_call_operand.vmem [shape: f32[32,1], index: 2, kind: input, shape index: {}]
  %s3 = inlined_call_operand.vmem [shape: f32[32,128], index: 3, kind: output, shape index: {}]
  %s4 = sld [smem:[#allocation0]]
  $region22: #{simple_cnn_forward.4} parent=0
    _
  %s6 = ssub.s32 1, %s4
  %s7 = scalar_select 0, %s6, %s4
  // Predicated region
  $region2: #{simple_cnn_forward.4} parent=0 // pred_check
    _
  $region3: #{simple_cnn_forward.4} parent=0 // pred_check_branch
    %9 = sbr.rel (0) target = $region5
  $region4: #{simple_cnn_forward.4} parent=0 // pred_region
    _
  $region5: #{simple_cnn_forward.4} parent=0 // pred_fallthru
    _
  // Predicated region
  $region6: #{simple_cnn_forward.4} parent=0 // pred_check
    _
  $region7: #{simple_cnn_forward.4} parent=0 // pred_check_branch
    %11 = sbr.rel (0) target = $region9
  $region8: #{simple_cnn_forward.4} parent=0 // pred_region
    _
  $region9: #{simple_cnn_forward.4} parent=0 // pred_fallthru
    _
  // Predicated region
  $region10: #{simple_cnn_forward.4} parent=0 // pred_check
    _
  $region11: #{simple_cnn_forward.4} parent=0 // pred_check_branch
    %13 = sbr.rel (0) target = $region13
  $region12: #{simple_cnn_forward.4} parent=0 // pred_region
    _
  $region13: #{simple_cnn_forward.4} parent=0 // pred_fallthru
    _
  %v15 = vld [vmem:[%s1] sm:$0xff]
  %v16 = vld [vmem:[%s1 + $0x8] sm:$0xff]
  %v17 = vld [vmem:[%s1 + $0x10] sm:$0xff]
  %v18 = vld [vmem:[%s1 + $0x18] sm:$0xff]
  %v19 = vld [vmem:[%s0] sm:$0xf]
  %v20 = vld [vmem:[%s0 + $0x4] sm:$0xf]
  %v21 = vld [vmem:[%s0 + $0x8] sm:$0xf]
  %v22 = vld [vmem:[%s0 + $0xc] sm:$0xf]
  %v23 = vld [vmem:[%s0 + $0x10] sm:$0xf]
  %v24 = vld [vmem:[%s0 + $0x14] sm:$0xf]
  %v25 = vld [vmem:[%s0 + $0x18] sm:$0xf]
  %v26 = vld [vmem:[%s0 + $0x1c] sm:$0xf]
  %v27 = vld [vmem:[%s0 + $0x20] sm:$0xf]
  %v28 = vld [vmem:[%s0 + $0x24] sm:$0xf]
  %v29 = vld [vmem:[%s0 + $0x28] sm:$0xf]
  %v30 = vld [vmem:[%s0 + $0x2c] sm:$0xf]
  %v31 = vld [vmem:[%s0 + $0x30] sm:$0xf]
  %v32 = vld [vmem:[%s0 + $0x34] sm:$0xf]
  %v33 = vld [vmem:[%s0 + $0x38] sm:$0xf]
  %v34 = vld [vmem:[%s0 + $0x3c] sm:$0xf]
  %v35 = vld [vmem:[%s0 + $0x40] sm:$0xf]
  %v36 = vld [vmem:[%s0 + $0x44] sm:$0xf]
  %v41 = vunpack.c.l.b16 %v15
  %v42 = vunpack.c.h.b16 %v15
  %v43 = vunpack.c.l.b16 %v16
  %v44 = vunpack.c.h.b16 %v16
  %v45 = vunpack.c.l.b16 %v17
  %v46 = vunpack.c.h.b16 %v17
  %v47 = vunpack.c.l.b16 %v18
  %v48 = vunpack.c.h.b16 %v18
  %v49 = vpack.c.b16 %v43, %v41
  %v50 = vpack.c.b16 %v44, %v42
  %v51 = vpack.c.b16 %v47, %v45
  %v52 = vpack.c.b16 %v48, %v46
  %v73 = vunpack.c.l.b16 %v19
  %v74 = vunpack.c.l.b16 %v20
  %v75 = vunpack.c.l.b16 %v21
  %v76 = vunpack.c.l.b16 %v22
  %v77 = vunpack.c.l.b16 %v23
  %v78 = vunpack.c.l.b16 %v24
  %v79 = vunpack.c.l.b16 %v25
  %v80 = vunpack.c.l.b16 %v26
  %v81 = vunpack.c.l.b16 %v27
  %v82 = vunpack.c.l.b16 %v28
  %v83 = vunpack.c.l.b16 %v29
  %v84 = vunpack.c.l.b16 %v30
  %v85 = vunpack.c.l.b16 %v31
  %v86 = vunpack.c.l.b16 %v32
  %v87 = vunpack.c.l.b16 %v33
  %v88 = vunpack.c.l.b16 %v34
  %v89 = vunpack.c.l.b16 %v35
  %v90 = vunpack.c.l.b16 %v36
  %v91 = vpack.c.b16 %v74, %v73
  %v92 = vpack.c.b16 %v76, %v75
  %v93 = vpack.c.b16 %v78, %v77
  %v94 = vpack.c.b16 %v80, %v79
  %v95 = vpack.c.b16 %v82, %v81
  %v96 = vpack.c.b16 %v84, %v83
  %v97 = vpack.c.b16 %v86, %v85
  %v98 = vpack.c.b16 %v88, %v87
  %v99 = vpack.c.b16 %v90, %v89
  %vm109 = vcmask 130048
  %v111 = vsel %vm109, %v50, 0
  %v114 = vsel %vm109, %v52, 0
  %116 = vmatpush.bf16.msra.mxu0 %v98
  %117 = vmatpush.bf16.msra.mxu0 %v97
  %118 = vmatpush.bf16.msra.mxu0 %v96
  %119 = vmatpush.bf16.msra.mxu0 %v95
  %120 = vmatpush.bf16.msra.mxu0 %v94
  %121 = vmatpush.bf16.msra.mxu0 %v93
  %122 = vmatpush.bf16.msra.mxu0 %v92
  %123 = vmatpush.bf16.msra.mxu0 %v91
  %124 = vmatmul.bf16.gmra.mxu0 %v49
  %v125 = vpop.f32.mrf.mxu0
  %v126 = vadd.f32 0.0, %v125
  %v127 = vpop.f32.mrf.mxu0
  %v128 = vadd.f32 0.0, %v127
  %129 = vmatmul.bf16.gmra.mxu0 %v51
  %v130 = vpop.f32.mrf.mxu0
  %v131 = vadd.f32 0.0, %v130
  %v132 = vpop.f32.mrf.mxu0
  %v133 = vadd.f32 0.0, %v132
  %134 = vdwg.mxu0
  %135 = vmatpush.bf16.msra.mxu0 0
  %136 = vmatpush.bf16.msra.mxu0 0
  %137 = vmatpush.bf16.msra.mxu0 0
  %138 = vmatpush.bf16.msra.mxu0 0
  %139 = vmatpush.bf16.msra.mxu0 0
  %140 = vmatpush.bf16.msra.mxu0 0
  %141 = vmatpush.bf16.msra.mxu0 0
  %142 = vmatpush.bf16.msra.mxu0 %v99
  %143 = vmatmul.bf16.gmra.mxu0 %v111
  %v144 = vpop.f32.mrf.mxu0
  %v145 = vadd.f32 %v126, %v144
  %v146 = vpop.f32.mrf.mxu0
  %v147 = vadd.f32 %v128, %v146
  %148 = vmatmul.bf16.gmra.mxu0 %v114
  %v149 = vpop.f32.mrf.mxu0
  %v150 = vadd.f32 %v131, %v149
  %v151 = vpop.f32.mrf.mxu0
  %v152 = vadd.f32 %v133, %v151
  %153 = vdwg.mxu0
  %s154 = scalar_lea.vmem %s0, 72
  %v155 = vld [vmem:[%s154] sm:$0xf]
  %v156 = vld [vmem:[%s154 + $0x4] sm:$0xf]
  %v157 = vld [vmem:[%s154 + $0x8] sm:$0xf]
  %v158 = vld [vmem:[%s154 + $0xc] sm:$0xf]
  %v159 = vld [vmem:[%s154 + $0x10] sm:$0xf]
  %v160 = vld [vmem:[%s154 + $0x14] sm:$0xf]
  %v161 = vld [vmem:[%s154 + $0x18] sm:$0xf]
  %v162 = vld [vmem:[%s154 + $0x1c] sm:$0xf]
  %v163 = vld [vmem:[%s154 + $0x20] sm:$0xf]
  %v164 = vld [vmem:[%s154 + $0x24] sm:$0xf]
  %v165 = vld [vmem:[%s154 + $0x28] sm:$0xf]
  %v166 = vld [vmem:[%s154 + $0x2c] sm:$0xf]
  %v167 = vld [vmem:[%s154 + $0x30] sm:$0xf]
  %v168 = vld [vmem:[%s154 + $0x34] sm:$0xf]
  %v169 = vld [vmem:[%s154 + $0x38] sm:$0xf]
  %v170 = vld [vmem:[%s154 + $0x3c] sm:$0xf]
  %v171 = vld [vmem:[%s154 + $0x40] sm:$0xf]
  %v172 = vld [vmem:[%s154 + $0x44] sm:$0xf]
  %v191 = vunpack.c.l.b16 %v155
  %v192 = vunpack.c.l.b16 %v156
  %v193 = vunpack.c.l.b16 %v157
  %v194 = vunpack.c.l.b16 %v158
  %v195 = vunpack.c.l.b16 %v159
  %v196 = vunpack.c.l.b16 %v160
  %v197 = vunpack.c.l.b16 %v161
  %v198 = vunpack.c.l.b16 %v162
  %v199 = vunpack.c.l.b16 %v163
  %v200 = vunpack.c.l.b16 %v164
  %v201 = vunpack.c.l.b16 %v165
  %v202 = vunpack.c.l.b16 %v166
  %v203 = vunpack.c.l.b16 %v167
  %v204 = vunpack.c.l.b16 %v168
  %v205 = vunpack.c.l.b16 %v169
  %v206 = vunpack.c.l.b16 %v170
  %v207 = vunpack.c.l.b16 %v171
  %v208 = vunpack.c.l.b16 %v172
  %v209 = vpack.c.b16 %v192, %v191
  %v210 = vpack.c.b16 %v194, %v193
  %v211 = vpack.c.b16 %v196, %v195
  %v212 = vpack.c.b16 %v198, %v197
  %v213 = vpack.c.b16 %v200, %v199
  %v214 = vpack.c.b16 %v202, %v201
  %v215 = vpack.c.b16 %v204, %v203
  %v216 = vpack.c.b16 %v206, %v205
  %v217 = vpack.c.b16 %v208, %v207
  %227 = vmatpush.bf16.msra.mxu0 %v216
  %228 = vmatpush.bf16.msra.mxu0 %v215
  %229 = vmatpush.bf16.msra.mxu0 %v214
  %230 = vmatpush.bf16.msra.mxu0 %v213
  %231 = vmatpush.bf16.msra.mxu0 %v212
  %232 = vmatpush.bf16.msra.mxu0 %v211
  %233 = vmatpush.bf16.msra.mxu0 %v210
  %234 = vmatpush.bf16.msra.mxu0 %v209
  %235 = vmatmul.bf16.gmra.mxu0 %v49
  %v236 = vpop.f32.mrf.mxu0
  %v237 = vadd.f32 0.0, %v236
  %v238 = vpop.f32.mrf.mxu0
  %v239 = vadd.f32 0.0, %v238
  %240 = vmatmul.bf16.gmra.mxu0 %v51
  %v241 = vpop.f32.mrf.mxu0
  %v242 = vadd.f32 0.0, %v241
  %v243 = vpop.f32.mrf.mxu0
  %v244 = vadd.f32 0.0, %v243
  %245 = vdwg.mxu0
  %246 = vmatpush.bf16.msra.mxu0 0
  %247 = vmatpush.bf16.msra.mxu0 0
  %248 = vmatpush.bf16.msra.mxu0 0
  %249 = vmatpush.bf16.msra.mxu0 0
  %250 = vmatpush.bf16.msra.mxu0 0
  %251 = vmatpush.bf16.msra.mxu0 0
  %252 = vmatpush.bf16.msra.mxu0 0
  %253 = vmatpush.bf16.msra.mxu0 %v217
  %254 = vmatmul.bf16.gmra.mxu0 %v111
  %v255 = vpop.f32.mrf.mxu0
  %v256 = vadd.f32 %v237, %v255
  %v257 = vpop.f32.mrf.mxu0
  %v258 = vadd.f32 %v239, %v257
  %259 = vmatmul.bf16.gmra.mxu0 %v114
  %v260 = vpop.f32.mrf.mxu0
  %v261 = vadd.f32 %v242, %v260
  %v262 = vpop.f32.mrf.mxu0
  %v263 = vadd.f32 %v244, %v262
  %264 = vdwg.mxu0
  %v265 = vmax.f32 %v145, %v256
  %v266 = vmax.f32 %v147, %v258
  %v267 = vmax.f32 %v150, %v261
  %v268 = vmax.f32 %v152, %v263
  %s269 = scalar_lea.vmem %s0, 144
  %v270 = vld [vmem:[%s269] sm:$0xf]
  %v271 = vld [vmem:[%s269 + $0x4] sm:$0xf]
  %v272 = vld [vmem:[%s269 + $0x8] sm:$0xf]
  %v273 = vld [vmem:[%s269 + $0xc] sm:$0xf]
  %v274 = vld [vmem:[%s269 + $0x10] sm:$0xf]
  %v275 = vld [vmem:[%s269 + $0x14] sm:$0xf]
  %v276 = vld [vmem:[%s269 + $0x18] sm:$0xf]
  %v277 = vld [vmem:[%s269 + $0x1c] sm:$0xf]
  %v278 = vld [vmem:[%s269 + $0x20] sm:$0xf]
  %v279 = vld [vmem:[%s269 + $0x24] sm:$0xf]
  %v280 = vld [vmem:[%s269 + $0x28] sm:$0xf]
  %v281 = vld [vmem:[%s269 + $0x2c] sm:$0xf]
  %v282 = vld [vmem:[%s269 + $0x30] sm:$0xf]
  %v283 = vld [vmem:[%s269 + $0x34] sm:$0xf]
  %v284 = vld [vmem:[%s269 + $0x38] sm:$0xf]
  %v285 = vld [vmem:[%s269 + $0x3c] sm:$0xf]
  %v286 = vld [vmem:[%s269 + $0x40] sm:$0xf]
  %v287 = vld [vmem:[%s269 + $0x44] sm:$0xf]
  %v306 = vunpack.c.l.b16 %v270
  %v307 = vunpack.c.l.b16 %v271
  %v308 = vunpack.c.l.b16 %v272
  %v309 = vunpack.c.l.b16 %v273
  %v310 = vunpack.c.l.b16 %v274
  %v311 = vunpack.c.l.b16 %v275
  %v312 = vunpack.c.l.b16 %v276
  %v313 = vunpack.c.l.b16 %v277
  %v314 = vunpack.c.l.b16 %v278
  %v315 = vunpack.c.l.b16 %v279
  %v316 = vunpack.c.l.b16 %v280
  %v317 = vunpack.c.l.b16 %v281
  %v318 = vunpack.c.l.b16 %v282
  %v319 = vunpack.c.l.b16 %v283
  %v320 = vunpack.c.l.b16 %v284
  %v321 = vunpack.c.l.b16 %v285
  %v322 = vunpack.c.l.b16 %v286
  %v323 = vunpack.c.l.b16 %v287
  %v324 = vpack.c.b16 %v307, %v306
  %v325 = vpack.c.b16 %v309, %v308
  %v326 = vpack.c.b16 %v311, %v310
  %v327 = vpack.c.b16 %v313, %v312
  %v328 = vpack.c.b16 %v315, %v314
  %v329 = vpack.c.b16 %v317, %v316
  %v330 = vpack.c.b16 %v319, %v318
  %v331 = vpack.c.b16 %v321, %v320
  %v332 = vpack.c.b16 %v323, %v322
  %342 = vmatpush.bf16.msra.mxu0 %v331
  %343 = vmatpush.bf16.msra.mxu0 %v330
  %344 = vmatpush.bf16.msra.mxu0 %v329
  %345 = vmatpush.bf16.msra.mxu0 %v328
  %346 = vmatpush.bf16.msra.mxu0 %v327
  %347 = vmatpush.bf16.msra.mxu0 %v326
  %348 = vmatpush.bf16.msra.mxu0 %v325
  %349 = vmatpush.bf16.msra.mxu0 %v324
  %350 = vmatmul.bf16.gmra.mxu0 %v49
  %v351 = vpop.f32.mrf.mxu0
  %v352 = vadd.f32 0.0, %v351
  %v353 = vpop.f32.mrf.mxu0
  %v354 = vadd.f32 0.0, %v353
  %355 = vmatmul.bf16.gmra.mxu0 %v51
  %v356 = vpop.f32.mrf.mxu0
  %v357 = vadd.f32 0.0, %v356
  %v358 = vpop.f32.mrf.mxu0
  %v359 = vadd.f32 0.0, %v358
  %360 = vdwg.mxu0
  %361 = vmatpush.bf16.msra.mxu0 0
  %362 = vmatpush.bf16.msra.mxu0 0
  %363 = vmatpush.bf16.msra.mxu0 0
  %364 = vmatpush.bf16.msra.mxu0 0
  %365 = vmatpush.bf16.msra.mxu0 0
  %366 = vmatpush.bf16.msra.mxu0 0
  %367 = vmatpush.bf16.msra.mxu0 0
  %368 = vmatpush.bf16.msra.mxu0 %v332
  %369 = vmatmul.bf16.gmra.mxu0 %v111
  %v370 = vpop.f32.mrf.mxu0
  %v371 = vadd.f32 %v352, %v370
  %v372 = vpop.f32.mrf.mxu0
  %v373 = vadd.f32 %v354, %v372
  %374 = vmatmul.bf16.gmra.mxu0 %v114
  %v375 = vpop.f32.mrf.mxu0
  %v376 = vadd.f32 %v357, %v375
  %v377 = vpop.f32.mrf.mxu0
  %v378 = vadd.f32 %v359, %v377
  %379 = vdwg.mxu0
  %v380 = vmax.f32 %v265, %v371
  %v381 = vmax.f32 %v266, %v373
  %v382 = vmax.f32 %v267, %v376
  %v383 = vmax.f32 %v268, %v378
  %s384 = scalar_lea.vmem %s0, 216
  %v385 = vld [vmem:[%s384] sm:$0xf]
  %v386 = vld [vmem:[%s384 + $0x4] sm:$0xf]
  %v387 = vld [vmem:[%s384 + $0x8] sm:$0xf]
  %v388 = vld [vmem:[%s384 + $0xc] sm:$0xf]
  %v389 = vld [vmem:[%s384 + $0x10] sm:$0xf]
  %v390 = vld [vmem:[%s384 + $0x14] sm:$0xf]
  %v391 = vld [vmem:[%s384 + $0x18] sm:$0xf]
  %v392 = vld [vmem:[%s384 + $0x1c] sm:$0xf]
  %v393 = vld [vmem:[%s384 + $0x20] sm:$0xf]
  %v394 = vld [vmem:[%s384 + $0x24] sm:$0xf]
  %v395 = vld [vmem:[%s384 + $0x28] sm:$0xf]
  %v396 = vld [vmem:[%s384 + $0x2c] sm:$0xf]
  %v397 = vld [vmem:[%s384 + $0x30] sm:$0xf]
  %v398 = vld [vmem:[%s384 + $0x34] sm:$0xf]
  %v399 = vld [vmem:[%s384 + $0x38] sm:$0xf]
  %v400 = vld [vmem:[%s384 + $0x3c] sm:$0xf]
  %v401 = vld [vmem:[%s384 + $0x40] sm:$0xf]
  %v402 = vld [vmem:[%s384 + $0x44] sm:$0xf]
  %v421 = vunpack.c.l.b16 %v385
  %v422 = vunpack.c.l.b16 %v386
  %v423 = vunpack.c.l.b16 %v387
  %v424 = vunpack.c.l.b16 %v388
  %v425 = vunpack.c.l.b16 %v389
  %v426 = vunpack.c.l.b16 %v390
  %v427 = vunpack.c.l.b16 %v391
  %v428 = vunpack.c.l.b16 %v392
  %v429 = vunpack.c.l.b16 %v393
  %v430 = vunpack.c.l.b16 %v394
  %v431 = vunpack.c.l.b16 %v395
  %v432 = vunpack.c.l.b16 %v396
  %v433 = vunpack.c.l.b16 %v397
  %v434 = vunpack.c.l.b16 %v398
  %v435 = vunpack.c.l.b16 %v399
  %v436 = vunpack.c.l.b16 %v400
  %v437 = vunpack.c.l.b16 %v401
  %v438 = vunpack.c.l.b16 %v402
  %v439 = vpack.c.b16 %v422, %v421
  %v440 = vpack.c.b16 %v424, %v423
  %v441 = vpack.c.b16 %v426, %v425
  %v442 = vpack.c.b16 %v428, %v427
  %v443 = vpack.c.b16 %v430, %v429
  %v444 = vpack.c.b16 %v432, %v431
  %v445 = vpack.c.b16 %v434, %v433
  %v446 = vpack.c.b16 %v436, %v435
  %v447 = vpack.c.b16 %v438, %v437
  %457 = vmatpush.bf16.msra.mxu0 %v446
  %458 = vmatpush.bf16.msra.mxu0 %v445
  %459 = vmatpush.bf16.msra.mxu0 %v444
  %460 = vmatpush.bf16.msra.mxu0 %v443
  %461 = vmatpush.bf16.msra.mxu0 %v442
  %462 = vmatpush.bf16.msra.mxu0 %v441
  %463 = vmatpush.bf16.msra.mxu0 %v440
  %464 = vmatpush.bf16.msra.mxu0 %v439
  %465 = vmatmul.bf16.gmra.mxu0 %v49
  %v466 = vpop.f32.mrf.mxu0
  %v467 = vadd.f32 0.0, %v466
  %v468 = vpop.f32.mrf.mxu0
  %v469 = vadd.f32 0.0, %v468
  %470 = vmatmul.bf16.gmra.mxu0 %v51
  %v471 = vpop.f32.mrf.mxu0
  %v472 = vadd.f32 0.0, %v471
  %v473 = vpop.f32.mrf.mxu0
  %v474 = vadd.f32 0.0, %v473
  %475 = vdwg.mxu0
  %476 = vmatpush.bf16.msra.mxu0 0
  %477 = vmatpush.bf16.msra.mxu0 0
  %478 = vmatpush.bf16.msra.mxu0 0
  %479 = vmatpush.bf16.msra.mxu0 0
  %480 = vmatpush.bf16.msra.mxu0 0
  %481 = vmatpush.bf16.msra.mxu0 0
  %482 = vmatpush.bf16.msra.mxu0 0
  %483 = vmatpush.bf16.msra.mxu0 %v447
  %484 = vmatmul.bf16.gmra.mxu0 %v111
  %v485 = vpop.f32.mrf.mxu0
  %v486 = vadd.f32 %v467, %v485
  %v487 = vpop.f32.mrf.mxu0
  %v488 = vadd.f32 %v469, %v487
  %489 = vmatmul.bf16.gmra.mxu0 %v114
  %v490 = vpop.f32.mrf.mxu0
  %v491 = vadd.f32 %v472, %v490
  %v492 = vpop.f32.mrf.mxu0
  %v493 = vadd.f32 %v474, %v492
  %494 = vdwg.mxu0
  %v495 = vmax.f32 %v380, %v486
  %v496 = vmax.f32 %v381, %v488
  %v497 = vmax.f32 %v382, %v491
  %v498 = vmax.f32 %v383, %v493
  %v499 = vld [vmem:[%s2] sm:$0xff]
  %v500 = vld [vmem:[%s2 + $0x8] sm:$0xff]
  %v501 = vld [vmem:[%s2 + $0x10] sm:$0xff]
  %v502 = vld [vmem:[%s2 + $0x18] sm:$0xff]
  %504 = vset.pattern.permute.xlu0 0
  %505 = vperm.xlu0 %504, %v499
  %v506 = vpop.permute.xlu0 %505
  %509 = vset.pattern.permute.xlu0 0
  %510 = vperm.xlu0 %509, %v500
  %v511 = vpop.permute.xlu0 %510
  %514 = vset.pattern.permute.xlu0 0
  %515 = vperm.xlu0 %514, %v501
  %v516 = vpop.permute.xlu0 %515
  %519 = vset.pattern.permute.xlu0 0
  %520 = vperm.xlu0 %519, %v502
  %v521 = vpop.permute.xlu0 %520
  %v523 = vadd.f32 %v495, %v506
  %v524 = vadd.f32 %v496, %v511
  %v525 = vadd.f32 %v497, %v516
  %v526 = vadd.f32 %v498, %v521
  %v527 = vmax.f32 %v523, 0.0
  %v528 = vmax.f32 %v524, 0.0
  %v529 = vmax.f32 %v525, 0.0
  %v530 = vmax.f32 %v526, 0.0
  %531 = vst [vmem:[%s3] sm:$0xff] %v527
  %532 = vst [vmem:[%s3 + $0x8] sm:$0xff] %v528
  %533 = vst [vmem:[%s3 + $0x10] sm:$0xff] %v529
  %534 = vst [vmem:[%s3 + $0x18] sm:$0xff] %v530
  // Predicated region
  $region14: #{simple_cnn_forward.4} parent=0 // pred_check
    _
  $region15: #{simple_cnn_forward.4} parent=0 // pred_check_branch
    %536 = sbr.rel (0) target = $region17
  $region16: #{simple_cnn_forward.4} parent=0 // pred_region
    _
  $region17: #{simple_cnn_forward.4} parent=0 // pred_fallthru
    _
  // Predicated region
  $region18: #{simple_cnn_forward.4} parent=0 // pred_check
    _
  $region19: #{simple_cnn_forward.4} parent=0 // pred_check_branch
    %538 = sbr.rel (0) target = $region21
  $region20: #{simple_cnn_forward.4} parent=0 // pred_region
    _
  $region21: #{simple_cnn_forward.4} parent=0 // pred_fallthru
    _

// kernel: simple_cnn_forward.5
$region0: #{simple_cnn_forward.5}
  #allocation0 [shape = 'u32[]', space=smem, size = 0x4, offset = 0x4, fixed_abs, tag = 'smem constant byte address 0x4 - core index']
  #allocation1 [shape = 'u32[72,128]{1,0:T(1,128)}', space=vmem, size = 0x9000, scoped, tag = 'internal scratch']
  %s0 = inlined_call_operand.vmem [shape: f32[2,2048], index: 0, kind: input, shape index: {}]
  %s1 = inlined_call_operand.vmem [shape: f32[2048,128], index: 1, kind: input, shape index: {}]
  %s2 = inlined_call_operand.vmem [shape: f32[1,128], index: 2, kind: input, shape index: {}]
  %s3 = inlined_call_operand.vmem [shape: f32[128,128], index: 3, kind: input, shape index: {}]
  %s4 = inlined_call_operand.vmem [shape: f32[1,128], index: 4, kind: input, shape index: {}]
  %s5 = inlined_call_operand.hbm [shape: f32[2,128], index: 5, kind: output, shape index: {}]
  %s6 = sld [smem:[#allocation0]]
  $region30: #{simple_cnn_forward.5} parent=0
    _
  %s8 = ssub.s32 1, %s6
  %s9 = scalar_select 0, %s8, %s6
  $region1: #{simple_cnn_forward.5} parent=0
    #allocation2 [shape = 'u8[1024]{0}', space=vmem, size = 0x400, scoped, tag = 'output window, operand 0, single buffered']
    #allocation3 [shape = 's32[1]{0}', space=sflag, size = 0x4, scoped, tag = 'scoped memory for simple_cnn_forward.5']
    %10 = vsyncpa [#allocation3], 0
    // Predicated region
    $region2: #{simple_cnn_forward.5} parent=1 // pred_check
      _
    $region3: #{simple_cnn_forward.5} parent=1 // pred_check_branch
      %12 = sbr.rel (0) target = $region5
    $region4: #{simple_cnn_forward.5} parent=1 // pred_region
      _
    $region5: #{simple_cnn_forward.5} parent=1 // pred_fallthru
      _
    // Predicated region
    $region6: #{simple_cnn_forward.5} parent=1 // pred_check
      _
    $region7: #{simple_cnn_forward.5} parent=1 // pred_check_branch
      %14 = sbr.rel (0) target = $region9
    $region8: #{simple_cnn_forward.5} parent=1 // pred_region
      _
    $region9: #{simple_cnn_forward.5} parent=1 // pred_fallthru
      _
    // Predicated region
    $region10: #{simple_cnn_forward.5} parent=1 // pred_check
      _
    $region11: #{simple_cnn_forward.5} parent=1 // pred_check_branch
      %16 = sbr.rel (0) target = $region13
    $region12: #{simple_cnn_forward.5} parent=1 // pred_region
      _
    $region13: #{simple_cnn_forward.5} parent=1 // pred_fallthru
      _
    // Predicated region
    $region14: #{simple_cnn_forward.5} parent=1 // pred_check
      _
    $region15: #{simple_cnn_forward.5} parent=1 // pred_check_branch
      %18 = sbr.rel (0) target = $region17
    $region16: #{simple_cnn_forward.5} parent=1 // pred_region
      _
    $region17: #{simple_cnn_forward.5} parent=1 // pred_fallthru
      _
    // Predicated region
    $region18: #{simple_cnn_forward.5} parent=1 // pred_check
      _
    $region19: #{simple_cnn_forward.5} parent=1 // pred_check_branch
      %20 = sbr.rel (0) target = $region21
    $region20: #{simple_cnn_forward.5} parent=1 // pred_region
      _
    $region21: #{simple_cnn_forward.5} parent=1 // pred_fallthru
      _
    %v21 = vld [vmem:[%s0] sm:$0xff]
    %v22 = vld [vmem:[%s0 + $0x8] sm:$0xff]
    %v23 = vld [vmem:[%s0 + $0x10] sm:$0xff]
    %v24 = vld [vmem:[%s0 + $0x18] sm:$0xff]
    %v25 = vld [vmem:[%s1] sm:$0xff]
    %v26 = vld [vmem:[%s1 + $0x8] sm:$0xff]
    %v27 = vld [vmem:[%s1 + $0x10] sm:$0xff]
    %v28 = vld [vmem:[%s1 + $0x18] sm:$0xff]
    %v29 = vld [vmem:[%s1 + $0x20] sm:$0xff]
    %v30 = vld [vmem:[%s1 + $0x28] sm:$0xff]
    %v31 = vld [vmem:[%s1 + $0x30] sm:$0xff]
    %v32 = vld [vmem:[%s1 + $0x38] sm:$0xff]
    %v33 = vld [vmem:[%s1 + $0x40] sm:$0xff]
    %v34 = vld [vmem:[%s1 + $0x48] sm:$0xff]
    %v35 = vld [vmem:[%s1 + $0x50] sm:$0xff]
    %v36 = vld [vmem:[%s1 + $0x58] sm:$0xff]
    %v37 = vld [vmem:[%s1 + $0x60] sm:$0xff]
    %v38 = vld [vmem:[%s1 + $0x68] sm:$0xff]
    %v39 = vld [vmem:[%s1 + $0x70] sm:$0xff]
    %v40 = vld [vmem:[%s1 + $0x78] sm:$0xff]
    %v41 = vld [vmem:[%s1 + $0x80] sm:$0xff]
    %v42 = vld [vmem:[%s1 + $0x88] sm:$0xff]
    %v43 = vld [vmem:[%s1 + $0x90] sm:$0xff]
    %v44 = vld [vmem:[%s1 + $0x98] sm:$0xff]
    %v45 = vld [vmem:[%s1 + $0xa0] sm:$0xff]
    %v46 = vld [vmem:[%s1 + $0xa8] sm:$0xff]
    %v47 = vld [vmem:[%s1 + $0xb0] sm:$0xff]
    %v48 = vld [vmem:[%s1 + $0xb8] sm:$0xff]
    %v49 = vld [vmem:[%s1 + $0xc0] sm:$0xff]
    %v50 = vld [vmem:[%s1 + $0xc8] sm:$0xff]
    %v51 = vld [vmem:[%s1 + $0xd0] sm:$0xff]
    %v52 = vld [vmem:[%s1 + $0xd8] sm:$0xff]
    %v53 = vld [vmem:[%s1 + $0xe0] sm:$0xff]
    %v54 = vld [vmem:[%s1 + $0xe8] sm:$0xff]
    %v55 = vld [vmem:[%s1 + $0xf0] sm:$0xff]
    %v56 = vld [vmem:[%s1 + $0xf8] sm:$0xff]
    %v57 = vld [vmem:[%s1 + $0x100] sm:$0xff]
    %v58 = vld [vmem:[%s1 + $0x108] sm:$0xff]
    %v59 = vld [vmem:[%s1 + $0x110] sm:$0xff]
    %v60 = vld [vmem:[%s1 + $0x118] sm:$0xff]
    %v61 = vld [vmem:[%s1 + $0x120] sm:$0xff]
    %v62 = vld [vmem:[%s1 + $0x128] sm:$0xff]
    %v63 = vld [vmem:[%s1 + $0x130] sm:$0xff]
    %v64 = vld [vmem:[%s1 + $0x138] sm:$0xff]
    %v65 = vld [vmem:[%s1 + $0x140] sm:$0xff]
    %v66 = vld [vmem:[%s1 + $0x148] sm:$0xff]
    %v67 = vld [vmem:[%s1 + $0x150] sm:$0xff]
    %v68 = vld [vmem:[%s1 + $0x158] sm:$0xff]
    %v69 = vld [vmem:[%s1 + $0x160] sm:$0xff]
    %v70 = vld [vmem:[%s1 + $0x168] sm:$0xff]
    %v71 = vld [vmem:[%s1 + $0x170] sm:$0xff]
    %v72 = vld [vmem:[%s1 + $0x178] sm:$0xff]
    %v73 = vld [vmem:[%s1 + $0x180] sm:$0xff]
    %v74 = vld [vmem:[%s1 + $0x188] sm:$0xff]
    %v75 = vld [vmem:[%s1 + $0x190] sm:$0xff]
    %v76 = vld [vmem:[%s1 + $0x198] sm:$0xff]
    %v77 = vld [vmem:[%s1 + $0x1a0] sm:$0xff]
    %v78 = vld [vmem:[%s1 + $0x1a8] sm:$0xff]
    %v79 = vld [vmem:[%s1 + $0x1b0] sm:$0xff]
    %v80 = vld [vmem:[%s1 + $0x1b8] sm:$0xff]
    %v81 = vld [vmem:[%s1 + $0x1c0] sm:$0xff]
    %v82 = vld [vmem:[%s1 + $0x1c8] sm:$0xff]
    %v83 = vld [vmem:[%s1 + $0x1d0] sm:$0xff]
    %v84 = vld [vmem:[%s1 + $0x1d8] sm:$0xff]
    %v85 = vld [vmem:[%s1 + $0x1e0] sm:$0xff]
    %v86 = vld [vmem:[%s1 + $0x1e8] sm:$0xff]
    %v87 = vld [vmem:[%s1 + $0x1f0] sm:$0xff]
    %v88 = vld [vmem:[%s1 + $0x1f8] sm:$0xff]
    %v89 = vld [vmem:[%s1 + $0x200] sm:$0xff]
    %v90 = vld [vmem:[%s1 + $0x208] sm:$0xff]
    %v91 = vld [vmem:[%s1 + $0x210] sm:$0xff]
    %v92 = vld [vmem:[%s1 + $0x218] sm:$0xff]
    %v93 = vld [vmem:[%s1 + $0x220] sm:$0xff]
    %v94 = vld [vmem:[%s1 + $0x228] sm:$0xff]
    %v95 = vld [vmem:[%s1 + $0x230] sm:$0xff]
    %v96 = vld [vmem:[%s1 + $0x238] sm:$0xff]
    %v97 = vld [vmem:[%s1 + $0x240] sm:$0xff]
    %v98 = vld [vmem:[%s1 + $0x248] sm:$0xff]
    %v99 = vld [vmem:[%s1 + $0x250] sm:$0xff]
    %v100 = vld [vmem:[%s1 + $0x258] sm:$0xff]
    %v101 = vld [vmem:[%s1 + $0x260] sm:$0xff]
    %v102 = vld [vmem:[%s1 + $0x268] sm:$0xff]
    %v103 = vld [vmem:[%s1 + $0x270] sm:$0xff]
    %v104 = vld [vmem:[%s1 + $0x278] sm:$0xff]
    %v105 = vld [vmem:[%s1 + $0x280] sm:$0xff]
    %v106 = vld [vmem:[%s1 + $0x288] sm:$0xff]
    %v107 = vld [vmem:[%s1 + $0x290] sm:$0xff]
    %v108 = vld [vmem:[%s1 + $0x298] sm:$0xff]
    %v109 = vld [vmem:[%s1 + $0x2a0] sm:$0xff]
    %v110 = vld [vmem:[%s1 + $0x2a8] sm:$0xff]
    %v111 = vld [vmem:[%s1 + $0x2b0] sm:$0xff]
    %v112 = vld [vmem:[%s1 + $0x2b8] sm:$0xff]
    %v113 = vld [vmem:[%s1 + $0x2c0] sm:$0xff]
    %v114 = vld [vmem:[%s1 + $0x2c8] sm:$0xff]
    %v115 = vld [vmem:[%s1 + $0x2d0] sm:$0xff]
    %v116 = vld [vmem:[%s1 + $0x2d8] sm:$0xff]
    %v117 = vld [vmem:[%s1 + $0x2e0] sm:$0xff]
    %v118 = vld [vmem:[%s1 + $0x2e8] sm:$0xff]
    %v119 = vld [vmem:[%s1 + $0x2f0] sm:$0xff]
    %v120 = vld [vmem:[%s1 + $0x2f8] sm:$0xff]
    %v121 = vld [vmem:[%s1 + $0x300] sm:$0xff]
    %v122 = vld [vmem:[%s1 + $0x308] sm:$0xff]
    %v123 = vld [vmem:[%s1 + $0x310] sm:$0xff]
    %v124 = vld [vmem:[%s1 + $0x318] sm:$0xff]
    %v125 = vld [vmem:[%s1 + $0x320] sm:$0xff]
    %v126 = vld [vmem:[%s1 + $0x328] sm:$0xff]
    %v127 = vld [vmem:[%s1 + $0x330] sm:$0xff]
    %v128 = vld [vmem:[%s1 + $0x338] sm:$0xff]
    %v129 = vld [vmem:[%s1 + $0x340] sm:$0xff]
    %v130 = vld [vmem:[%s1 + $0x348] sm:$0xff]
    %v131 = vld [vmem:[%s1 + $0x350] sm:$0xff]
    %v132 = vld [vmem:[%s1 + $0x358] sm:$0xff]
    %v133 = vld [vmem:[%s1 + $0x360] sm:$0xff]
    %v134 = vld [vmem:[%s1 + $0x368] sm:$0xff]
    %v135 = vld [vmem:[%s1 + $0x370] sm:$0xff]
    %v136 = vld [vmem:[%s1 + $0x378] sm:$0xff]
    %v137 = vld [vmem:[%s1 + $0x380] sm:$0xff]
    %v138 = vld [vmem:[%s1 + $0x388] sm:$0xff]
    %v139 = vld [vmem:[%s1 + $0x390] sm:$0xff]
    %v140 = vld [vmem:[%s1 + $0x398] sm:$0xff]
    %v141 = vld [vmem:[%s1 + $0x3a0] sm:$0xff]
    %v142 = vld [vmem:[%s1 + $0x3a8] sm:$0xff]
    %v143 = vld [vmem:[%s1 + $0x3b0] sm:$0xff]
    %v144 = vld [vmem:[%s1 + $0x3b8] sm:$0xff]
    %v145 = vld [vmem:[%s1 + $0x3c0] sm:$0xff]
    %v146 = vld [vmem:[%s1 + $0x3c8] sm:$0xff]
    %v147 = vld [vmem:[%s1 + $0x3d0] sm:$0xff]
    %v148 = vld [vmem:[%s1 + $0x3d8] sm:$0xff]
    %v149 = vld [vmem:[%s1 + $0x3e0] sm:$0xff]
    %v150 = vld [vmem:[%s1 + $0x3e8] sm:$0xff]
    %v151 = vld [vmem:[%s1 + $0x3f0] sm:$0xff]
    %v152 = vld [vmem:[%s1 + $0x3f8] sm:$0xff]
    %v153 = vld [vmem:[%s1 + $0x400] sm:$0xff]
    %v154 = vld [vmem:[%s1 + $0x408] sm:$0xff]
    %v155 = vld [vmem:[%s1 + $0x410] sm:$0xff]
    %v156 = vld [vmem:[%s1 + $0x418] sm:$0xff]
    %v157 = vld [vmem:[%s1 + $0x420] sm:$0xff]
    %v158 = vld [vmem:[%s1 + $0x428] sm:$0xff]
    %v159 = vld [vmem:[%s1 + $0x430] sm:$0xff]
    %v160 = vld [vmem:[%s1 + $0x438] sm:$0xff]
    %v161 = vld [vmem:[%s1 + $0x440] sm:$0xff]
    %v162 = vld [vmem:[%s1 + $0x448] sm:$0xff]
    %v163 = vld [vmem:[%s1 + $0x450] sm:$0xff]
    %v164 = vld [vmem:[%s1 + $0x458] sm:$0xff]
    %v165 = vld [vmem:[%s1 + $0x460] sm:$0xff]
    %v166 = vld [vmem:[%s1 + $0x468] sm:$0xff]
    %v167 = vld [vmem:[%s1 + $0x470] sm:$0xff]
    %v168 = vld [vmem:[%s1 + $0x478] sm:$0xff]
    %v169 = vld [vmem:[%s1 + $0x480] sm:$0xff]
    %v170 = vld [vmem:[%s1 + $0x488] sm:$0xff]
    %v171 = vld [vmem:[%s1 + $0x490] sm:$0xff]
    %v172 = vld [vmem:[%s1 + $0x498] sm:$0xff]
    %v173 = vld [vmem:[%s1 + $0x4a0] sm:$0xff]
    %v174 = vld [vmem:[%s1 + $0x4a8] sm:$0xff]
    %v175 = vld [vmem:[%s1 + $0x4b0] sm:$0xff]
    %v176 = vld [vmem:[%s1 + $0x4b8] sm:$0xff]
    %v177 = vld [vmem:[%s1 + $0x4c0] sm:$0xff]
    %v178 = vld [vmem:[%s1 + $0x4c8] sm:$0xff]
    %v179 = vld [vmem:[%s1 + $0x4d0] sm:$0xff]
    %v180 = vld [vmem:[%s1 + $0x4d8] sm:$0xff]
    %v181 = vld [vmem:[%s1 + $0x4e0] sm:$0xff]
    %v182 = vld [vmem:[%s1 + $0x4e8] sm:$0xff]
    %v183 = vld [vmem:[%s1 + $0x4f0] sm:$0xff]
    %v184 = vld [vmem:[%s1 + $0x4f8] sm:$0xff]
    %v185 = vld [vmem:[%s1 + $0x500] sm:$0xff]
    %v186 = vld [vmem:[%s1 + $0x508] sm:$0xff]
    %v187 = vld [vmem:[%s1 + $0x510] sm:$0xff]
    %v188 = vld [vmem:[%s1 + $0x518] sm:$0xff]
    %v189 = vld [vmem:[%s1 + $0x520] sm:$0xff]
    %v190 = vld [vmem:[%s1 + $0x528] sm:$0xff]
    %v191 = vld [vmem:[%s1 + $0x530] sm:$0xff]
    %v192 = vld [vmem:[%s1 + $0x538] sm:$0xff]
    %v193 = vld [vmem:[%s1 + $0x540] sm:$0xff]
    %v194 = vld [vmem:[%s1 + $0x548] sm:$0xff]
    %v195 = vld [vmem:[%s1 + $0x550] sm:$0xff]
    %v196 = vld [vmem:[%s1 + $0x558] sm:$0xff]
    %v197 = vld [vmem:[%s1 + $0x560] sm:$0xff]
    %v198 = vld [vmem:[%s1 + $0x568] sm:$0xff]
    %v199 = vld [vmem:[%s1 + $0x570] sm:$0xff]
    %v200 = vld [vmem:[%s1 + $0x578] sm:$0xff]
    %v201 = vld [vmem:[%s1 + $0x580] sm:$0xff]
    %v202 = vld [vmem:[%s1 + $0x588] sm:$0xff]
    %v203 = vld [vmem:[%s1 + $0x590] sm:$0xff]
    %v204 = vld [vmem:[%s1 + $0x598] sm:$0xff]
    %v205 = vld [vmem:[%s1 + $0x5a0] sm:$0xff]
    %v206 = vld [vmem:[%s1 + $0x5a8] sm:$0xff]
    %v207 = vld [vmem:[%s1 + $0x5b0] sm:$0xff]
    %v208 = vld [vmem:[%s1 + $0x5b8] sm:$0xff]
    %v209 = vld [vmem:[%s1 + $0x5c0] sm:$0xff]
    %v210 = vld [vmem:[%s1 + $0x5c8] sm:$0xff]
    %v211 = vld [vmem:[%s1 + $0x5d0] sm:$0xff]
    %v212 = vld [vmem:[%s1 + $0x5d8] sm:$0xff]
    %v213 = vld [vmem:[%s1 + $0x5e0] sm:$0xff]
    %v214 = vld [vmem:[%s1 + $0x5e8] sm:$0xff]
    %v215 = vld [vmem:[%s1 + $0x5f0] sm:$0xff]
    %v216 = vld [vmem:[%s1 + $0x5f8] sm:$0xff]
    %v217 = vld [vmem:[%s1 + $0x600] sm:$0xff]
    %v218 = vld [vmem:[%s1 + $0x608] sm:$0xff]
    %v219 = vld [vmem:[%s1 + $0x610] sm:$0xff]
    %v220 = vld [vmem:[%s1 + $0x618] sm:$0xff]
    %v221 = vld [vmem:[%s1 + $0x620] sm:$0xff]
    %v222 = vld [vmem:[%s1 + $0x628] sm:$0xff]
    %v223 = vld [vmem:[%s1 + $0x630] sm:$0xff]
    %v224 = vld [vmem:[%s1 + $0x638] sm:$0xff]
    %v225 = vld [vmem:[%s1 + $0x640] sm:$0xff]
    %v226 = vld [vmem:[%s1 + $0x648] sm:$0xff]
    %v227 = vld [vmem:[%s1 + $0x650] sm:$0xff]
    %v228 = vld [vmem:[%s1 + $0x658] sm:$0xff]
    %v229 = vld [vmem:[%s1 + $0x660] sm:$0xff]
    %v230 = vld [vmem:[%s1 + $0x668] sm:$0xff]
    %v231 = vld [vmem:[%s1 + $0x670] sm:$0xff]
    %v232 = vld [vmem:[%s1 + $0x678] sm:$0xff]
    %v233 = vld [vmem:[%s1 + $0x680] sm:$0xff]
    %v234 = vld [vmem:[%s1 + $0x688] sm:$0xff]
    %v235 = vld [vmem:[%s1 + $0x690] sm:$0xff]
    %v236 = vld [vmem:[%s1 + $0x698] sm:$0xff]
    %v237 = vld [vmem:[%s1 + $0x6a0] sm:$0xff]
    %v238 = vld [vmem:[%s1 + $0x6a8] sm:$0xff]
    %v239 = vld [vmem:[%s1 + $0x6b0] sm:$0xff]
    %v240 = vld [vmem:[%s1 + $0x6b8] sm:$0xff]
    %v241 = vld [vmem:[%s1 + $0x6c0] sm:$0xff]
    %v242 = vld [vmem:[%s1 + $0x6c8] sm:$0xff]
    %v243 = vld [vmem:[%s1 + $0x6d0] sm:$0xff]
    %v244 = vld [vmem:[%s1 + $0x6d8] sm:$0xff]
    %v245 = vld [vmem:[%s1 + $0x6e0] sm:$0xff]
    %v246 = vld [vmem:[%s1 + $0x6e8] sm:$0xff]
    %v247 = vld [vmem:[%s1 + $0x6f0] sm:$0xff]
    %v248 = vld [vmem:[%s1 + $0x6f8] sm:$0xff]
    %v249 = vld [vmem:[%s1 + $0x700] sm:$0xff]
    %v250 = vld [vmem:[%s1 + $0x708] sm:$0xff]
    %v251 = vld [vmem:[%s1 + $0x710] sm:$0xff]
    %v252 = vld [vmem:[%s1 + $0x718] sm:$0xff]
    %v253 = vld [vmem:[%s1 + $0x720] sm:$0xff]
    %v254 = vld [vmem:[%s1 + $0x728] sm:$0xff]
    %v255 = vld [vmem:[%s1 + $0x730] sm:$0xff]
    %v256 = vld [vmem:[%s1 + $0x738] sm:$0xff]
    %v257 = vld [vmem:[%s1 + $0x740] sm:$0xff]
    %v258 = vld [vmem:[%s1 + $0x748] sm:$0xff]
    %v259 = vld [vmem:[%s1 + $0x750] sm:$0xff]
    %v260 = vld [vmem:[%s1 + $0x758] sm:$0xff]
    %v261 = vld [vmem:[%s1 + $0x760] sm:$0xff]
    %v262 = vld [vmem:[%s1 + $0x768] sm:$0xff]
    %v263 = vld [vmem:[%s1 + $0x770] sm:$0xff]
    %v264 = vld [vmem:[%s1 + $0x778] sm:$0xff]
    %v265 = vld [vmem:[%s1 + $0x780] sm:$0xff]
    %v266 = vld [vmem:[%s1 + $0x788] sm:$0xff]
    %v267 = vld [vmem:[%s1 + $0x790] sm:$0xff]
    %v268 = vld [vmem:[%s1 + $0x798] sm:$0xff]
    %v269 = vld [vmem:[%s1 + $0x7a0] sm:$0xff]
    %v270 = vld [vmem:[%s1 + $0x7a8] sm:$0xff]
    %v271 = vld [vmem:[%s1 + $0x7b0] sm:$0xff]
    %v272 = vld [vmem:[%s1 + $0x7b8] sm:$0xff]
    %v273 = vld [vmem:[%s1 + $0x7c0] sm:$0xff]
    %v274 = vld [vmem:[%s1 + $0x7c8] sm:$0xff]
    %v275 = vld [vmem:[%s1 + $0x7d0] sm:$0xff]
    %v276 = vld [vmem:[%s1 + $0x7d8] sm:$0xff]
    %v277 = vld [vmem:[%s1 + $0x7e0] sm:$0xff]
    %v278 = vld [vmem:[%s1 + $0x7e8] sm:$0xff]
    %v279 = vld [vmem:[%s1 + $0x7f0] sm:$0xff]
    %v280 = vld [vmem:[%s1 + $0x7f8] sm:$0xff]
    %v281 = vld [vmem:[%s2] sm:$0x1]
    %v283 = vperm.slane %v281, 0
    %289 = vst [vmem:[#allocation1] ss:$4 sm:$0xff] %v21
    %s290 = scalar_lea.vmem [#allocation1], 32
    %291 = vst [vmem:[%s290] ss:$4 sm:$0xff] %v22
    %v292 = vld.sshfl [vmem:[#allocation1] sm:$0xff pattern:$0x73625140]
    %v293 = vld.sshfl [vmem:[#allocation1 + $0x8] sm:$0xff pattern:$0x73625140]
    %v294 = vld.sshfl [vmem:[#allocation1 + $0x10] sm:$0xff pattern:$0x73625140]
    %v295 = vld.sshfl [vmem:[#allocation1 + $0x18] sm:$0xff pattern:$0x73625140]
    %v296 = vld.sshfl [vmem:[#allocation1 + $0x20] sm:$0xff pattern:$0x73625140]
    %v297 = vld.sshfl [vmem:[#allocation1 + $0x28] sm:$0xff pattern:$0x73625140]
    %v298 = vld.sshfl [vmem:[#allocation1 + $0x30] sm:$0xff pattern:$0x73625140]
    %v299 = vld.sshfl [vmem:[#allocation1 + $0x38] sm:$0xff pattern:$0x73625140]
    %300 = vst [vmem:[#allocation1] ss:$4 sm:$0xff] %v23
    %301 = vst [vmem:[%s290] ss:$4 sm:$0xff] %v24
    %v302 = vld.sshfl [vmem:[#allocation1] sm:$0xff pattern:$0x73625140]
    %v303 = vld.sshfl [vmem:[#allocation1 + $0x8] sm:$0xff pattern:$0x73625140]
    %v304 = vld.sshfl [vmem:[#allocation1 + $0x10] sm:$0xff pattern:$0x73625140]
    %v305 = vld.sshfl [vmem:[#allocation1 + $0x18] sm:$0xff pattern:$0x73625140]
    %v306 = vld.sshfl [vmem:[#allocation1 + $0x20] sm:$0xff pattern:$0x73625140]
    %v307 = vld.sshfl [vmem:[#allocation1 + $0x28] sm:$0xff pattern:$0x73625140]
    %v308 = vld.sshfl [vmem:[#allocation1 + $0x30] sm:$0xff pattern:$0x73625140]
    %v309 = vld.sshfl [vmem:[#allocation1 + $0x38] sm:$0xff pattern:$0x73625140]
    %326 = vmatpush.msra.mxu0 %v40
    %327 = vmatpush.msra.mxu0 %v39
    %328 = vmatpush.msra.mxu0 %v38
    %329 = vmatpush.msra.mxu0 %v37
    %330 = vmatpush.msra.mxu0 %v36
    %331 = vmatpush.msra.mxu0 %v35
    %332 = vmatpush.msra.mxu0 %v34
    %333 = vmatpush.msra.mxu0 %v33
    %334 = vmatpush.msra.mxu0 %v32
    %335 = vmatpush.msra.mxu0 %v31
    %336 = vmatpush.msra.mxu0 %v30
    %337 = vmatpush.msra.mxu0 %v29
    %338 = vmatpush.msra.mxu0 %v28
    %339 = vmatpush.msra.mxu0 %v27
    %340 = vmatpush.msra.mxu0 %v26
    %341 = vmatpush.msra.mxu0 %v25
    %342 = vmatmul.f32.gmra.mxu0 %v292
    %v343 = vpop.f32.mrf.mxu0
    %v344 = vadd.f32 %v283, %v343
    %345 = vdwg.mxu0
    %346 = vmatpush.msra.mxu0 %v56
    %347 = vmatpush.msra.mxu0 %v55
    %348 = vmatpush.msra.mxu0 %v54
    %349 = vmatpush.msra.mxu0 %v53
    %350 = vmatpush.msra.mxu0 %v52
    %351 = vmatpush.msra.mxu0 %v51
    %352 = vmatpush.msra.mxu0 %v50
    %353 = vmatpush.msra.mxu0 %v49
    %354 = vmatpush.msra.mxu0 %v48
    %355 = vmatpush.msra.mxu0 %v47
    %356 = vmatpush.msra.mxu0 %v46
    %357 = vmatpush.msra.mxu0 %v45
    %358 = vmatpush.msra.mxu0 %v44
    %359 = vmatpush.msra.mxu0 %v43
    %360 = vmatpush.msra.mxu0 %v42
    %361 = vmatpush.msra.mxu0 %v41
    %362 = vmatmul.f32.gmra.mxu0 %v293
    %v363 = vpop.f32.mrf.mxu0
    %v364 = vadd.f32 %v344, %v363
    %365 = vdwg.mxu0
    %366 = vmatpush.msra.mxu0 %v72
    %367 = vmatpush.msra.mxu0 %v71
    %368 = vmatpush.msra.mxu0 %v70
    %369 = vmatpush.msra.mxu0 %v69
    %370 = vmatpush.msra.mxu0 %v68
    %371 = vmatpush.msra.mxu0 %v67
    %372 = vmatpush.msra.mxu0 %v66
    %373 = vmatpush.msra.mxu0 %v65
    %374 = vmatpush.msra.mxu0 %v64
    %375 = vmatpush.msra.mxu0 %v63
    %376 = vmatpush.msra.mxu0 %v62
    %377 = vmatpush.msra.mxu0 %v61
    %378 = vmatpush.msra.mxu0 %v60
    %379 = vmatpush.msra.mxu0 %v59
    %380 = vmatpush.msra.mxu0 %v58
    %381 = vmatpush.msra.mxu0 %v57
    %382 = vmatmul.f32.gmra.mxu0 %v294
    %v383 = vpop.f32.mrf.mxu0
    %v384 = vadd.f32 %v364, %v383
    %385 = vdwg.mxu0
    %386 = vmatpush.msra.mxu0 %v88
    %387 = vmatpush.msra.mxu0 %v87
    %388 = vmatpush.msra.mxu0 %v86
    %389 = vmatpush.msra.mxu0 %v85
    %390 = vmatpush.msra.mxu0 %v84
    %391 = vmatpush.msra.mxu0 %v83
    %392 = vmatpush.msra.mxu0 %v82
    %393 = vmatpush.msra.mxu0 %v81
    %394 = vmatpush.msra.mxu0 %v80
    %395 = vmatpush.msra.mxu0 %v79
    %396 = vmatpush.msra.mxu0 %v78
    %397 = vmatpush.msra.mxu0 %v77
    %398 = vmatpush.msra.mxu0 %v76
    %399 = vmatpush.msra.mxu0 %v75
    %400 = vmatpush.msra.mxu0 %v74
    %401 = vmatpush.msra.mxu0 %v73
    %402 = vmatmul.f32.gmra.mxu0 %v295
    %v403 = vpop.f32.mrf.mxu0
    %v404 = vadd.f32 %v384, %v403
    %405 = vdwg.mxu0
    %406 = vmatpush.msra.mxu0 %v104
    %407 = vmatpush.msra.mxu0 %v103
    %408 = vmatpush.msra.mxu0 %v102
    %409 = vmatpush.msra.mxu0 %v101
    %410 = vmatpush.msra.mxu0 %v100
    %411 = vmatpush.msra.mxu0 %v99
    %412 = vmatpush.msra.mxu0 %v98
    %413 = vmatpush.msra.mxu0 %v97
    %414 = vmatpush.msra.mxu0 %v96
    %415 = vmatpush.msra.mxu0 %v95
    %416 = vmatpush.msra.mxu0 %v94
    %417 = vmatpush.msra.mxu0 %v93
    %418 = vmatpush.msra.mxu0 %v92
    %419 = vmatpush.msra.mxu0 %v91
    %420 = vmatpush.msra.mxu0 %v90
    %421 = vmatpush.msra.mxu0 %v89
    %422 = vmatmul.f32.gmra.mxu0 %v296
    %v423 = vpop.f32.mrf.mxu0
    %v424 = vadd.f32 %v404, %v423
    %425 = vdwg.mxu0
    %426 = vmatpush.msra.mxu0 %v120
    %427 = vmatpush.msra.mxu0 %v119
    %428 = vmatpush.msra.mxu0 %v118
    %429 = vmatpush.msra.mxu0 %v117
    %430 = vmatpush.msra.mxu0 %v116
    %431 = vmatpush.msra.mxu0 %v115
    %432 = vmatpush.msra.mxu0 %v114
    %433 = vmatpush.msra.mxu0 %v113
    %434 = vmatpush.msra.mxu0 %v112
    %435 = vmatpush.msra.mxu0 %v111
    %436 = vmatpush.msra.mxu0 %v110
    %437 = vmatpush.msra.mxu0 %v109
    %438 = vmatpush.msra.mxu0 %v108
    %439 = vmatpush.msra.mxu0 %v107
    %440 = vmatpush.msra.mxu0 %v106
    %441 = vmatpush.msra.mxu0 %v105
    %442 = vmatmul.f32.gmra.mxu0 %v297
    %v443 = vpop.f32.mrf.mxu0
    %v444 = vadd.f32 %v424, %v443
    %445 = vdwg.mxu0
    %446 = vmatpush.msra.mxu0 %v136
    %447 = vmatpush.msra.mxu0 %v135
    %448 = vmatpush.msra.mxu0 %v134
    %449 = vmatpush.msra.mxu0 %v133
    %450 = vmatpush.msra.mxu0 %v132
    %451 = vmatpush.msra.mxu0 %v131
    %452 = vmatpush.msra.mxu0 %v130
    %453 = vmatpush.msra.mxu0 %v129
    %454 = vmatpush.msra.mxu0 %v128
    %455 = vmatpush.msra.mxu0 %v127
    %456 = vmatpush.msra.mxu0 %v126
    %457 = vmatpush.msra.mxu0 %v125
    %458 = vmatpush.msra.mxu0 %v124
    %459 = vmatpush.msra.mxu0 %v123
    %460 = vmatpush.msra.mxu0 %v122
    %461 = vmatpush.msra.mxu0 %v121
    %462 = vmatmul.f32.gmra.mxu0 %v298
    %v463 = vpop.f32.mrf.mxu0
    %v464 = vadd.f32 %v444, %v463
    %465 = vdwg.mxu0
    %466 = vmatpush.msra.mxu0 %v152
    %467 = vmatpush.msra.mxu0 %v151
    %468 = vmatpush.msra.mxu0 %v150
    %469 = vmatpush.msra.mxu0 %v149
    %470 = vmatpush.msra.mxu0 %v148
    %471 = vmatpush.msra.mxu0 %v147
    %472 = vmatpush.msra.mxu0 %v146
    %473 = vmatpush.msra.mxu0 %v145
    %474 = vmatpush.msra.mxu0 %v144
    %475 = vmatpush.msra.mxu0 %v143
    %476 = vmatpush.msra.mxu0 %v142
    %477 = vmatpush.msra.mxu0 %v141
    %478 = vmatpush.msra.mxu0 %v140
    %479 = vmatpush.msra.mxu0 %v139
    %480 = vmatpush.msra.mxu0 %v138
    %481 = vmatpush.msra.mxu0 %v137
    %482 = vmatmul.f32.gmra.mxu0 %v299
    %v483 = vpop.f32.mrf.mxu0
    %v484 = vadd.f32 %v464, %v483
    %485 = vdwg.mxu0
    %486 = vmatpush.msra.mxu0 %v168
    %487 = vmatpush.msra.mxu0 %v167
    %488 = vmatpush.msra.mxu0 %v166
    %489 = vmatpush.msra.mxu0 %v165
    %490 = vmatpush.msra.mxu0 %v164
    %491 = vmatpush.msra.mxu0 %v163
    %492 = vmatpush.msra.mxu0 %v162
    %493 = vmatpush.msra.mxu0 %v161
    %494 = vmatpush.msra.mxu0 %v160
    %495 = vmatpush.msra.mxu0 %v159
    %496 = vmatpush.msra.mxu0 %v158
    %497 = vmatpush.msra.mxu0 %v157
    %498 = vmatpush.msra.mxu0 %v156
    %499 = vmatpush.msra.mxu0 %v155
    %500 = vmatpush.msra.mxu0 %v154
    %501 = vmatpush.msra.mxu0 %v153
    %502 = vmatmul.f32.gmra.mxu0 %v302
    %v503 = vpop.f32.mrf.mxu0
    %v504 = vadd.f32 %v484, %v503
    %505 = vdwg.mxu0
    %506 = vmatpush.msra.mxu0 %v184
    %507 = vmatpush.msra.mxu0 %v183
    %508 = vmatpush.msra.mxu0 %v182
    %509 = vmatpush.msra.mxu0 %v181
    %510 = vmatpush.msra.mxu0 %v180
    %511 = vmatpush.msra.mxu0 %v179
    %512 = vmatpush.msra.mxu0 %v178
    %513 = vmatpush.msra.mxu0 %v177
    %514 = vmatpush.msra.mxu0 %v176
    %515 = vmatpush.msra.mxu0 %v175
    %516 = vmatpush.msra.mxu0 %v174
    %517 = vmatpush.msra.mxu0 %v173
    %518 = vmatpush.msra.mxu0 %v172
    %519 = vmatpush.msra.mxu0 %v171
    %520 = vmatpush.msra.mxu0 %v170
    %521 = vmatpush.msra.mxu0 %v169
    %522 = vmatmul.f32.gmra.mxu0 %v303
    %v523 = vpop.f32.mrf.mxu0
    %v524 = vadd.f32 %v504, %v523
    %525 = vdwg.mxu0
    %526 = vmatpush.msra.mxu0 %v200
    %527 = vmatpush.msra.mxu0 %v199
    %528 = vmatpush.msra.mxu0 %v198
    %529 = vmatpush.msra.mxu0 %v197
    %530 = vmatpush.msra.mxu0 %v196
    %531 = vmatpush.msra.mxu0 %v195
    %532 = vmatpush.msra.mxu0 %v194
    %533 = vmatpush.msra.mxu0 %v193
    %534 = vmatpush.msra.mxu0 %v192
    %535 = vmatpush.msra.mxu0 %v191
    %536 = vmatpush.msra.mxu0 %v190
    %537 = vmatpush.msra.mxu0 %v189
    %538 = vmatpush.msra.mxu0 %v188
    %539 = vmatpush.msra.mxu0 %v187
    %540 = vmatpush.msra.mxu0 %v186
    %541 = vmatpush.msra.mxu0 %v185
    %542 = vmatmul.f32.gmra.mxu0 %v304
    %v543 = vpop.f32.mrf.mxu0
    %v544 = vadd.f32 %v524, %v543
    %545 = vdwg.mxu0
    %546 = vmatpush.msra.mxu0 %v216
    %547 = vmatpush.msra.mxu0 %v215
    %548 = vmatpush.msra.mxu0 %v214
    %549 = vmatpush.msra.mxu0 %v213
    %550 = vmatpush.msra.mxu0 %v212
    %551 = vmatpush.msra.mxu0 %v211
    %552 = vmatpush.msra.mxu0 %v210
    %553 = vmatpush.msra.mxu0 %v209
    %554 = vmatpush.msra.mxu0 %v208
    %555 = vmatpush.msra.mxu0 %v207
    %556 = vmatpush.msra.mxu0 %v206
    %557 = vmatpush.msra.mxu0 %v205
    %558 = vmatpush.msra.mxu0 %v204
    %559 = vmatpush.msra.mxu0 %v203
    %560 = vmatpush.msra.mxu0 %v202
    %561 = vmatpush.msra.mxu0 %v201
    %562 = vmatmul.f32.gmra.mxu0 %v305
    %v563 = vpop.f32.mrf.mxu0
    %v564 = vadd.f32 %v544, %v563
    %565 = vdwg.mxu0
    %566 = vmatpush.msra.mxu0 %v232
    %567 = vmatpush.msra.mxu0 %v231
    %568 = vmatpush.msra.mxu0 %v230
    %569 = vmatpush.msra.mxu0 %v229
    %570 = vmatpush.msra.mxu0 %v228
    %571 = vmatpush.msra.mxu0 %v227
    %572 = vmatpush.msra.mxu0 %v226
    %573 = vmatpush.msra.mxu0 %v225
    %574 = vmatpush.msra.mxu0 %v224
    %575 = vmatpush.msra.mxu0 %v223
    %576 = vmatpush.msra.mxu0 %v222
    %577 = vmatpush.msra.mxu0 %v221
    %578 = vmatpush.msra.mxu0 %v220
    %579 = vmatpush.msra.mxu0 %v219
    %580 = vmatpush.msra.mxu0 %v218
    %581 = vmatpush.msra.mxu0 %v217
    %582 = vmatmul.f32.gmra.mxu0 %v306
    %v583 = vpop.f32.mrf.mxu0
    %v584 = vadd.f32 %v564, %v583
    %585 = vdwg.mxu0
    %586 = vmatpush.msra.mxu0 %v248
    %587 = vmatpush.msra.mxu0 %v247
    %588 = vmatpush.msra.mxu0 %v246
    %589 = vmatpush.msra.mxu0 %v245
    %590 = vmatpush.msra.mxu0 %v244
    %591 = vmatpush.msra.mxu0 %v243
    %592 = vmatpush.msra.mxu0 %v242
    %593 = vmatpush.msra.mxu0 %v241
    %594 = vmatpush.msra.mxu0 %v240
    %595 = vmatpush.msra.mxu0 %v239
    %596 = vmatpush.msra.mxu0 %v238
    %597 = vmatpush.msra.mxu0 %v237
    %598 = vmatpush.msra.mxu0 %v236
    %599 = vmatpush.msra.mxu0 %v235
    %600 = vmatpush.msra.mxu0 %v234
    %601 = vmatpush.msra.mxu0 %v233
    %602 = vmatmul.f32.gmra.mxu0 %v307
    %v603 = vpop.f32.mrf.mxu0
    %v604 = vadd.f32 %v584, %v603
    %605 = vdwg.mxu0
    %606 = vmatpush.msra.mxu0 %v264
    %607 = vmatpush.msra.mxu0 %v263
    %608 = vmatpush.msra.mxu0 %v262
    %609 = vmatpush.msra.mxu0 %v261
    %610 = vmatpush.msra.mxu0 %v260
    %611 = vmatpush.msra.mxu0 %v259
    %612 = vmatpush.msra.mxu0 %v258
    %613 = vmatpush.msra.mxu0 %v257
    %614 = vmatpush.msra.mxu0 %v256
    %615 = vmatpush.msra.mxu0 %v255
    %616 = vmatpush.msra.mxu0 %v254
    %617 = vmatpush.msra.mxu0 %v253
    %618 = vmatpush.msra.mxu0 %v252
    %619 = vmatpush.msra.mxu0 %v251
    %620 = vmatpush.msra.mxu0 %v250
    %621 = vmatpush.msra.mxu0 %v249
    %622 = vmatmul.f32.gmra.mxu0 %v308
    %v623 = vpop.f32.mrf.mxu0
    %v624 = vadd.f32 %v604, %v623
    %625 = vdwg.mxu0
    %626 = vmatpush.msra.mxu0 %v280
    %627 = vmatpush.msra.mxu0 %v279
    %628 = vmatpush.msra.mxu0 %v278
    %629 = vmatpush.msra.mxu0 %v277
    %630 = vmatpush.msra.mxu0 %v276
    %631 = vmatpush.msra.mxu0 %v275
    %632 = vmatpush.msra.mxu0 %v274
    %633 = vmatpush.msra.mxu0 %v273
    %634 = vmatpush.msra.mxu0 %v272
    %635 = vmatpush.msra.mxu0 %v271
    %636 = vmatpush.msra.mxu0 %v270
    %637 = vmatpush.msra.mxu0 %v269
    %638 = vmatpush.msra.mxu0 %v268
    %639 = vmatpush.msra.mxu0 %v267
    %640 = vmatpush.msra.mxu0 %v266
    %641 = vmatpush.msra.mxu0 %v265
    %642 = vmatmul.f32.gmra.mxu0 %v309
    %v643 = vpop.f32.mrf.mxu0
    %v644 = vadd.f32 %v624, %v643
    %645 = vdwg.mxu0
    %v646 = vmax.f32 %v644, 0.0
    %v647 = vld [vmem:[%s3] sm:$0xff]
    %v648 = vld [vmem:[%s3 + $0x8] sm:$0xff]
    %v649 = vld [vmem:[%s3 + $0x10] sm:$0xff]
    %v650 = vld [vmem:[%s3 + $0x18] sm:$0xff]
    %v651 = vld [vmem:[%s3 + $0x20] sm:$0xff]
    %v652 = vld [vmem:[%s3 + $0x28] sm:$0xff]
    %v653 = vld [vmem:[%s3 + $0x30] sm:$0xff]
    %v654 = vld [vmem:[%s3 + $0x38] sm:$0xff]
    %v655 = vld [vmem:[%s3 + $0x40] sm:$0xff]
    %v656 = vld [vmem:[%s3 + $0x48] sm:$0xff]
    %v657 = vld [vmem:[%s3 + $0x50] sm:$0xff]
    %v658 = vld [vmem:[%s3 + $0x58] sm:$0xff]
    %v659 = vld [vmem:[%s3 + $0x60] sm:$0xff]
    %v660 = vld [vmem:[%s3 + $0x68] sm:$0xff]
    %v661 = vld [vmem:[%s3 + $0x70] sm:$0xff]
    %v662 = vld [vmem:[%s3 + $0x78] sm:$0xff]
    %v663 = vld [vmem:[%s4] sm:$0x1]
    %v665 = vperm.slane %v663, 0
    %667 = vmatpush.msra.mxu0 %v662
    %668 = vmatpush.msra.mxu0 %v661
    %669 = vmatpush.msra.mxu0 %v660
    %670 = vmatpush.msra.mxu0 %v659
    %671 = vmatpush.msra.mxu0 %v658
    %672 = vmatpush.msra.mxu0 %v657
    %673 = vmatpush.msra.mxu0 %v656
    %674 = vmatpush.msra.mxu0 %v655
    %675 = vmatpush.msra.mxu0 %v654
    %676 = vmatpush.msra.mxu0 %v653
    %677 = vmatpush.msra.mxu0 %v652
    %678 = vmatpush.msra.mxu0 %v651
    %679 = vmatpush.msra.mxu0 %v650
    %680 = vmatpush.msra.mxu0 %v649
    %681 = vmatpush.msra.mxu0 %v648
    %682 = vmatpush.msra.mxu0 %v647
    %683 = vmatmul.f32.gmra.mxu0 %v646
    %v684 = vpop.f32.mrf.mxu0
    %v685 = vadd.f32 %v665, %v684
    %686 = vdwg.mxu0
    %687 = vst [vmem:[#allocation2] sm:$0x3] %v685
    // Predicated region
    $region22: #{simple_cnn_forward.5} parent=1 // pred_check
      _
    $region23: #{simple_cnn_forward.5} parent=1 // pred_check_branch
      %689 = sbr.rel (0) target = $region25
    $region24: #{simple_cnn_forward.5} parent=1 // pred_region
      %691 = vsyncadd [#allocation3], 0
      %s693 = sshll.u32 [#allocation2], 4
      %s694 = int_to_ptr.vmem [resolvable:$true] %s693
      %s695 = sshll.u32 %s5, 4
      %s696 = int_to_ptr.hbm [resolvable:$true] %s695
      %698 = dma.vmem_to_hbm [thread:$0]  %s694, 32, %s696, [#allocation3]
    $region25: #{simple_cnn_forward.5} parent=1 // pred_fallthru
      _
    // Predicated region
    $region26: #{simple_cnn_forward.5} parent=1 // pred_check
      _
    $region27: #{simple_cnn_forward.5} parent=1 // pred_check_branch
      %700 = sbr.rel (0) target = $region29
    $region28: #{simple_cnn_forward.5} parent=1 // pred_region
      %702 = dma.done [#allocation3], 32
    $region29: #{simple_cnn_forward.5} parent=1 // pred_fallthru
      _
    %703 = vsyncpa [#allocation3], 1

</llo_original>
